<compile_context>
chip_gen: v7x
topology: tpu7x:2x2x1
jax: 0.10.0
libtpu: 0.0.40
codegen_flags: <defaults>
</compile_context>

<pallas_src>
import functools

import jax
import jax.numpy as jnp
from jax.experimental import pallas as pl
from jax.experimental.pallas import tpu as pltpu


def _round_up(x, m):
    return ((x + m - 1) // m) * m


def _vmem_capacity_bytes():
    """Per-generation VMEM capacity (128 MiB v5e/v6e, 64 MiB v7x)."""
    try:
        info = pltpu.get_tpu_info()
        cap = getattr(info, "vmem_capacity_bytes", None)
        if cap:
            return int(cap)
    except Exception:
        pass
    return 64 * 1024 * 1024  # conservative fallback (v7x-sized)


def _spec(block_shape, index_map, single_buffer=False):
    """BlockSpec; optionally single-buffered for blocks that never change."""
    if single_buffer and hasattr(pl, "Buffered"):
        try:
            return pl.BlockSpec(block_shape, index_map,
                                pipeline_mode=pl.Buffered(1))
        except TypeError:
            pass
    return pl.BlockSpec(block_shape, index_map)


def _plan_tiles(n, f_in, f_h, num_slots, vmem_cap, force_stream_a):
    """Pick padded N, row tile tm, and whether A is fully VMEM-resident."""
    n_pad = _round_up(max(n, 128), 128)
    budget = int(vmem_cap * 0.85)
    fixed = (n_pad * f_in * 2                 # X (bf16, single buffer)
             + num_slots * n_pad * f_h * 2    # H ping-pong scratch (bf16)
             + 2 * f_in * f_h * 4             # W0 (headroom: assume 2 bufs)
             + 2 * f_h * f_h * 4              # W_rest double buffer
             + 4 * f_h * 4)                   # biases
    tms = [t for t in range(min(512, n_pad), 0, -128) if n_pad % t == 0]

    # Full-A residency: A fetched from HBM once instead of once per layer.
    if not force_stream_a:
        tm = tms[0]
        if fixed + n_pad * n_pad * 2 + 2 * tm * f_h * 4 <= budget:
            return n_pad, tm, True

    # Streamed (tm, N) bf16 A row blocks (double-buffered by the pipeline).
    for tm in tms:
        if fixed + 2 * tm * n_pad * 2 + 2 * tm * f_h * 4 <= budget:
            return n_pad, tm, False
    return n_pad, tms[-1], False


def _gcn_fused_kernel(a_ref, x_ref, w0_ref, b0_ref, wr_ref, br_ref,
                      out_ref, h_scratch, *, tm, num_layers, num_slots,
                      a_resident):
    l = pl.program_id(0)          # layer index (strictly sequential)
    i = pl.program_id(1)          # row-tile index
    row = pl.multiple_of(i * tm, tm)
    is_last = l == num_layers - 1

    if a_resident:
        a_rows = a_ref[pl.ds(row, tm), :]     # (tm, Np) bf16, A resident
    else:
        a_rows = a_ref[...]                   # (tm, Np) bf16, streamed block

    def epilogue(out_f32):
        @pl.when(jnp.logical_not(is_last))
        def _():
            # Hidden layer: ReLU, keep activations resident in VMEM (bf16).
            dst = jax.lax.rem(l, num_slots)
            h_scratch[dst, pl.ds(row, tm), :] = (
                jnp.maximum(out_f32, 0.0).astype(h_scratch.dtype))

        @pl.when(is_last)
        def _():
            # Final layer: lane-dense (tm, f_h) logits block to HBM.
            out_ref[...] = out_f32.astype(out_ref.dtype)

    @pl.when(l == 0)
    def _():
        # Layer 0 reads the padded input features directly (width f_in).
        # bf16 x bf16 MXU matmuls, f32 accumulation.
        agg = jnp.dot(a_rows, x_ref[...], preferred_element_type=jnp.float32)
        out = jnp.dot(agg, w0_ref[...], preferred_element_type=jnp.float32)
        epilogue(out + b0_ref[...])

    @pl.when(l > 0)
    def _():
        # Later layers read the previous layer's activations (width f_h).
        src = jax.lax.rem(l + num_slots - 1, num_slots)   # (l-1) % slots, >=0
        agg = jnp.dot(a_rows, h_scratch[src],
                      preferred_element_type=jnp.float32)
        out = jnp.dot(agg, wr_ref[0], preferred_element_type=jnp.float32)
        epilogue(out + br_ref[0])


def gcn_forward(a_norm, in_feat, params, *, force_stream_a=False):
    """GCN.forward: all GraphConv layers fused into one Pallas call."""
    n = a_norm.shape[0]
    num_layers = len(params)
    num_classes = params[-1][0].shape[1]

    f_in = _round_up(in_feat.shape[1], 128)
    f_h = max(_round_up(w.shape[1], 128) for w, _ in params)
    num_slots = 1 if num_layers <= 2 else 2

    vmem_cap = _vmem_capacity_bytes()
    n_pad, tm, a_resident = _plan_tiles(n, f_in, f_h, num_slots, vmem_cap,
                                        force_stream_a)
    num_tiles = n_pad // tm

    def pad2(x, r, c):
        return jnp.pad(x, ((0, r - x.shape[0]), (0, c - x.shape[1])))

    # Zero padding keeps padded rows/cols inert through every layer.
    a_pad = pad2(a_norm.astype(jnp.float32), n_pad, n_pad).astype(jnp.bfloat16)
    x_pad = pad2(in_feat.astype(jnp.float32), n_pad, f_in).astype(jnp.bfloat16)

    w0, b0 = params[0]
    w0_pad = pad2(w0.astype(jnp.float32), f_in, f_h)
    b0_pad = jnp.pad(b0.astype(jnp.float32),
                     (0, f_h - b0.shape[0])).reshape(1, f_h)

    if num_layers > 1:
        rest = params[1:]
    else:  # dummy, never read (the l > 0 branch never executes)
        rest = [(jnp.zeros((f_h, f_h), jnp.float32),
                 jnp.zeros((f_h,), jnp.float32))]
    wr = jnp.stack([pad2(w.astype(jnp.float32), f_h, f_h) for w, _ in rest])
    br = jnp.stack([jnp.pad(b.astype(jnp.float32),
                            (0, f_h - b.shape[0])).reshape(1, f_h)
                    for _, b in rest])

    if a_resident:
        a_spec = _spec((n_pad, n_pad), lambda l, i: (0, 0), single_buffer=True)
    else:
        a_spec = pl.BlockSpec((tm, n_pad), lambda l, i: (i, 0))
    x_spec = _spec((n_pad, f_in), lambda l, i: (0, 0), single_buffer=True)
    w0_spec = _spec((f_in, f_h), lambda l, i: (0, 0), single_buffer=True)
    b0_spec = _spec((1, f_h), lambda l, i: (0, 0), single_buffer=True)
    wr_spec = pl.BlockSpec((1, f_h, f_h),
                           lambda l, i: (jnp.maximum(l - 1, 0), 0, 0))
    br_spec = pl.BlockSpec((1, 1, f_h),
                           lambda l, i: (jnp.maximum(l - 1, 0), 0, 0))
    # Non-final layers never write the output; collapse their block index to
    # (0, 0) so no garbage/unwritten block is ever DMA'd back to HBM.
    out_spec = pl.BlockSpec(
        (tm, f_h), lambda l, i: (jnp.where(l == num_layers - 1, i, 0), 0))

    kernel = functools.partial(_gcn_fused_kernel, tm=tm,
                               num_layers=num_layers, num_slots=num_slots,
                               a_resident=a_resident)

    a_vmem = n_pad * n_pad * 2 if a_resident else 2 * tm * n_pad * 2
    vmem_need = (a_vmem
                 + n_pad * f_in * 2
                 + num_slots * n_pad * f_h * 2
                 + 2 * f_in * f_h * 4
                 + 2 * f_h * f_h * 4
                 + 4 * f_h * 4
                 + 2 * tm * f_h * 4)
    vmem_limit = int(min(vmem_cap,
                         max(int(vmem_need * 1.25) + (2 << 20), 16 << 20)))

    flops = (2 * n_pad * n_pad * (f_in + (num_layers - 1) * f_h)
             + 2 * n_pad * (f_in * f_h + (num_layers - 1) * f_h * f_h))
    bytes_accessed = (n_pad * n_pad * 2 * (1 if a_resident else num_layers)
                      + n_pad * f_in * 2
                      + 4 * (f_in * f_h + max(num_layers - 1, 1) * f_h * f_h
                             + num_layers * f_h)
                      + n_pad * f_h * 4)

    out_padded = pl.pallas_call(
        kernel,
        out_shape=jax.ShapeDtypeStruct((n_pad, f_h), jnp.float32),
        grid_spec=pltpu.PrefetchScalarGridSpec(
            num_scalar_prefetch=0,
            grid=(num_layers, num_tiles),
            in_specs=[a_spec, x_spec, w0_spec, b0_spec, wr_spec, br_spec],
            out_specs=out_spec,
            scratch_shapes=[pltpu.VMEM((num_slots, n_pad, f_h),
                                       jnp.bfloat16)],
        ),
        compiler_params=pltpu.CompilerParams(
            # Row-tile axis is NOT "parallel": every tile of layer l+1 reads
            # all rows written into the per-core VMEM scratch by layer l.
            dimension_semantics=("arbitrary", "arbitrary"),
            vmem_limit_bytes=vmem_limit,
        ),
        cost_estimate=pl.CostEstimate(
            flops=flops, transcendentals=0, bytes_accessed=bytes_accessed),
    )(a_pad, x_pad, w0_pad, b0_pad, wr, br)

    return out_padded[:n, :num_classes]


def init_gcn_params(key, in_feats, h_feats, num_classes):
    """Deterministic Xavier-uniform weights, zero biases (matches DGL init)."""
    if not isinstance(h_feats, (list, tuple)):
        h_feats = [h_feats]
    dims = [in_feats] + list(h_feats) + [num_classes]
    params = []
    for i in range(1, len(dims)):
        key, sub = jax.random.split(key)
        fan_in, fan_out = dims[i - 1], dims[i]
        limit = jnp.sqrt(6.0 / (fan_in + fan_out))
        w = jax.random.uniform(sub, (fan_in, fan_out), jnp.float32,
                               minval=-limit, maxval=limit)
        b = jnp.zeros((fan_out,), jnp.float32)
        params.append((w, b))
    return params


def build_normalized_adjacency(key, num_nodes, edge_prob=0.1):
    """Dense symmetric random graph with self-loops, 'both' normalization."""
    a = jax.random.bernoulli(key, edge_prob, (num_nodes, num_nodes))
    a = jnp.logical_or(a, a.T).astype(jnp.float32)
    a = jnp.maximum(a, jnp.eye(num_nodes, dtype=jnp.float32))  # self-loops
    deg = a.sum(axis=1)
    d_inv_sqrt = jax.lax.rsqrt(deg)
    return a * d_inv_sqrt[:, None] * d_inv_sqrt[None, :]  # D^-1/2 A D^-1/2


def gcn_forward_ref(a_norm, in_feat, params):
    """Pure-JAX reference for correctness checking."""
    h = in_feat
    for w, b in params[:-1]:
        h = jnp.maximum(a_norm @ (h @ w) + b, 0.0)
    w, b = params[-1]
    return a_norm @ (h @ w) + b


if __name__ == "__main__":
    key = jax.random.PRNGKey(0)
    k_graph, k_feat, k_params = jax.random.split(key, 3)

    # Case 1: small graph -> A fully resident in VMEM, 2-layer net.
    num_nodes, in_feats, h_feats, num_classes = 128, 32, [64], 8
    a_norm = build_normalized_adjacency(k_graph, num_nodes)
    in_feat = jax.random.normal(k_feat, (num_nodes, in_feats), jnp.float32)
    params = init_gcn_params(k_params, in_feats, h_feats, num_classes)

    out = jax.block_until_ready(gcn_forward(a_norm, in_feat, params))
    ref = gcn_forward_ref(a_norm, in_feat, params)
    assert out.shape == (num_nodes, num_classes)
    assert jnp.allclose(out, ref, atol=5e-2, rtol=5e-2), (
        float(jnp.max(jnp.abs(out - ref))))

    # Case 2: non-multiple-of-128 N (padded), 3 layers (ping-pong scratch),
    # forced streaming of (tm, N) A row blocks across multiple row tiles.
    k2g, k2f, k2p = jax.random.split(jax.random.PRNGKey(0), 3)
    num_nodes2, in_feats2, h_feats2, num_classes2 = 520, 40, [64, 32], 8
    a2 = build_normalized_adjacency(k2g, num_nodes2)
    x2 = jax.random.normal(k2f, (num_nodes2, in_feats2), jnp.float32)
    p2 = init_gcn_params(k2p, in_feats2, h_feats2, num_classes2)

    out2 = jax.block_until_ready(gcn_forward(a2, x2, p2, force_stream_a=True))
    ref2 = gcn_forward_ref(a2, x2, p2)
    assert out2.shape == (num_nodes2, num_classes2)
    assert jnp.allclose(out2, ref2, atol=5e-2, rtol=5e-2), (
        float(jnp.max(jnp.abs(out2 - ref2))))

    print("KERNEL_OK")
</pallas_src>

<mosaic_0001>
module attributes {stable_mosaic.version = 11 : i64} {
  func.func @_gcn_fused_kernel(%arg0: i32, %arg1: i32, %arg2: memref<128x128xbf16, #tpu.memory_space<vmem>>, %arg3: memref<128x128xbf16, #tpu.memory_space<vmem>>, %arg4: memref<128x128xf32, #tpu.memory_space<vmem>>, %arg5: memref<1x128xf32, #tpu.memory_space<vmem>>, %arg6: memref<1x128x128xf32, #tpu.memory_space<vmem>>, %arg7: memref<1x1x128xf32, #tpu.memory_space<vmem>>, %arg8: memref<128x128xf32, #tpu.memory_space<vmem>>, %arg9: memref<1x128x128xbf16, #tpu.memory_space<vmem>>) attributes {dimension_semantics = [#tpu.dimension_semantics<arbitrary>, #tpu.dimension_semantics<arbitrary>], iteration_bounds = array<i64: 2, 1>, scalar_prefetch = 0 : i64, scratch_operands = 1 : i64, tpu.core_type = #tpu.core_type<tc>, window_params = [{pipeline_mode = #tpu.pipeline_mode<synchronous>, transform_indices = @transform_0, window_bounds = array<i64: 128, 128>}, {pipeline_mode = #tpu.pipeline_mode<synchronous>, transform_indices = @transform_1, window_bounds = array<i64: 128, 128>}, {pipeline_mode = #tpu.pipeline_mode<synchronous>, transform_indices = @transform_2, window_bounds = array<i64: 128, 128>}, {pipeline_mode = #tpu.pipeline_mode<synchronous>, transform_indices = @transform_3, window_bounds = array<i64: 1, 128>}, {transform_indices = @transform_4, window_bounds = array<i64: 1, 128, 128>}, {transform_indices = @transform_5, window_bounds = array<i64: 1, 1, 128>}, {transform_indices = @transform_6, window_bounds = array<i64: 128, 128>}]} {
    %c128_i32 = arith.constant 128 : i32
    %0 = arith.muli %arg1, %c128_i32 : i32
    %1 = tpu.assume_multiple %0, 128 : i32
    %c1_i32 = arith.constant 1 : i32
    %2 = arith.cmpi eq, %arg0, %c1_i32 : i32
    %3 = arith.index_cast %1 : i32 to index
    %c0 = arith.constant 0 : index
    %4 = vector.load %arg2[%3, %c0] : memref<128x128xbf16, #tpu.memory_space<vmem>>, vector<128x128xbf16>
    %c0_i32 = arith.constant 0 : i32
    %5 = arith.cmpi eq, %arg0, %c0_i32 : i32
    %6 = arith.extui %5 : i1 to i32
    %c0_i32_0 = arith.constant 0 : i32
    %7 = arith.cmpi ne, %6, %c0_i32_0 : i32
    scf.if %7 {
      %c0_3 = arith.constant 0 : index
      %c0_4 = arith.constant 0 : index
      %11 = vector.load %arg3[%c0_3, %c0_4] : memref<128x128xbf16, #tpu.memory_space<vmem>>, vector<128x128xbf16>
      %cst = arith.constant dense<0.000000e+00> : vector<128x128xf32>
      %12 = tpu.matmul %4, %11, %cst {dimension_numbers = #tpu.dot_dimension_numbers<[1], [0], [0], [1], [0, 0, 1, 1], [], []>} : vector<128x128xbf16>, vector<128x128xbf16>, vector<128x128xf32> -> vector<128x128xf32>
      %c0_5 = arith.constant 0 : index
      %c0_6 = arith.constant 0 : index
      %13 = vector.load %arg4[%c0_5, %c0_6] : memref<128x128xf32, #tpu.memory_space<vmem>>, vector<128x128xf32>
      %cst_7 = arith.constant dense<0.000000e+00> : vector<128x128xf32>
      %14 = tpu.matmul %12, %13, %cst_7 {dimension_numbers = #tpu.dot_dimension_numbers<[1], [0], [0], [1], [0, 0, 1, 1], [], []>} : vector<128x128xf32>, vector<128x128xf32>, vector<128x128xf32> -> vector<128x128xf32>
      %c0_8 = arith.constant 0 : index
      %c0_9 = arith.constant 0 : index
      %15 = vector.load %arg5[%c0_8, %c0_9] : memref<1x128xf32, #tpu.memory_space<vmem>>, vector<1x128xf32>
      %16 = vector.broadcast %15 : vector<1x128xf32> to vector<128x128xf32>
      %17 = arith.addf %14, %16 : vector<128x128xf32>
      %true = arith.constant true
      %18 = arith.xori %2, %true : i1
      %19 = arith.extui %18 : i1 to i32
      %c0_i32_10 = arith.constant 0 : i32
      %20 = arith.cmpi ne, %19, %c0_i32_10 : i32
      scf.if %20 {
        %c1_i32_12 = arith.constant 1 : i32
        %23 = arith.remsi %arg0, %c1_i32_12 : i32
        %cst_13 = arith.constant 0.000000e+00 : f32
        %24 = vector.broadcast %cst_13 : f32 to vector<128x128xf32>
        %25 = arith.maximumf %17, %24 : vector<128x128xf32>
        %26 = arith.truncf %25 : vector<128x128xf32> to vector<128x128xbf16>
        %27 = arith.index_cast %23 : i32 to index
        %28 = arith.index_cast %1 : i32 to index
        %c0_14 = arith.constant 0 : index
        %29 = vector.load %arg9[%27, %28, %c0_14] : memref<1x128x128xbf16, #tpu.memory_space<vmem>>, vector<1x128x128xbf16>
        %30 = vector.shape_cast %29 : vector<1x128x128xbf16> to vector<128x128xbf16>
        %31 = vector.shape_cast %26 : vector<128x128xbf16> to vector<1x128x128xbf16>
        tpu.vector_store %arg9[%27, %28, %c0_14], %31 {strides = array<i32>} : memref<1x128x128xbf16, #tpu.memory_space<vmem>>, vector<1x128x128xbf16>,
      } else {
      }
      %21 = arith.extui %2 : i1 to i32
      %c0_i32_11 = arith.constant 0 : i32
      %22 = arith.cmpi ne, %21, %c0_i32_11 : i32
      scf.if %22 {
        %c0_12 = arith.constant 0 : index
        %c0_13 = arith.constant 0 : index
        %23 = vector.load %arg8[%c0_12, %c0_13] : memref<128x128xf32, #tpu.memory_space<vmem>>, vector<128x128xf32>
        tpu.vector_store %arg8[%c0_12, %c0_13], %17 {strides = array<i32>} : memref<128x128xf32, #tpu.memory_space<vmem>>, vector<128x128xf32>,
      } else {
      }
    } else {
    }
    %c0_i32_1 = arith.constant 0 : i32
    %8 = arith.cmpi sgt, %arg0, %c0_i32_1 : i32
    %9 = arith.extui %8 : i1 to i32
    %c0_i32_2 = arith.constant 0 : i32
    %10 = arith.cmpi ne, %9, %c0_i32_2 : i32
    scf.if %10 {
      %c1_i32_3 = arith.constant 1 : i32
      %11 = arith.addi %arg0, %c1_i32_3 : i32
      %c1_i32_4 = arith.constant 1 : i32
      %12 = arith.subi %11, %c1_i32_4 : i32
      %c1_i32_5 = arith.constant 1 : i32
      %13 = arith.remsi %12, %c1_i32_5 : i32
      %14 = arith.index_cast %13 : i32 to index
      %c0_6 = arith.constant 0 : index
      %c0_7 = arith.constant 0 : index
      %15 = vector.load %arg9[%14, %c0_6, %c0_7] : memref<1x128x128xbf16, #tpu.memory_space<vmem>>, vector<1x128x128xbf16>
      %16 = vector.shape_cast %15 : vector<1x128x128xbf16> to vector<128x128xbf16>
      %cst = arith.constant dense<0.000000e+00> : vector<128x128xf32>
      %17 = tpu.matmul %4, %16, %cst {dimension_numbers = #tpu.dot_dimension_numbers<[1], [0], [0], [1], [0, 0, 1, 1], [], []>} : vector<128x128xbf16>, vector<128x128xbf16>, vector<128x128xf32> -> vector<128x128xf32>
      %c0_8 = arith.constant 0 : index
      %c0_9 = arith.constant 0 : index
      %c0_10 = arith.constant 0 : index
      %18 = vector.load %arg6[%c0_8, %c0_9, %c0_10] : memref<1x128x128xf32, #tpu.memory_space<vmem>>, vector<1x128x128xf32>
      %19 = vector.shape_cast %18 : vector<1x128x128xf32> to vector<128x128xf32>
      %cst_11 = arith.constant dense<0.000000e+00> : vector<128x128xf32>
      %20 = tpu.matmul %17, %19, %cst_11 {dimension_numbers = #tpu.dot_dimension_numbers<[1], [0], [0], [1], [0, 0, 1, 1], [], []>} : vector<128x128xf32>, vector<128x128xf32>, vector<128x128xf32> -> vector<128x128xf32>
      %c0_12 = arith.constant 0 : index
      %c0_13 = arith.constant 0 : index
      %c0_14 = arith.constant 0 : index
      %21 = vector.load %arg7[%c0_12, %c0_13, %c0_14] : memref<1x1x128xf32, #tpu.memory_space<vmem>>, vector<1x1x128xf32>
      %22 = vector.shape_cast %21 : vector<1x1x128xf32> to vector<1x128xf32>
      %23 = vector.broadcast %22 : vector<1x128xf32> to vector<128x128xf32>
      %24 = arith.addf %20, %23 : vector<128x128xf32>
      %true = arith.constant true
      %25 = arith.xori %2, %true : i1
      %26 = arith.extui %25 : i1 to i32
      %c0_i32_15 = arith.constant 0 : i32
      %27 = arith.cmpi ne, %26, %c0_i32_15 : i32
      scf.if %27 {
        %c1_i32_17 = arith.constant 1 : i32
        %30 = arith.remsi %arg0, %c1_i32_17 : i32
        %cst_18 = arith.constant 0.000000e+00 : f32
        %31 = vector.broadcast %cst_18 : f32 to vector<128x128xf32>
        %32 = arith.maximumf %24, %31 : vector<128x128xf32>
        %33 = arith.truncf %32 : vector<128x128xf32> to vector<128x128xbf16>
        %34 = arith.index_cast %30 : i32 to index
        %35 = arith.index_cast %1 : i32 to index
        %c0_19 = arith.constant 0 : index
        %36 = vector.load %arg9[%34, %35, %c0_19] : memref<1x128x128xbf16, #tpu.memory_space<vmem>>, vector<1x128x128xbf16>
        %37 = vector.shape_cast %36 : vector<1x128x128xbf16> to vector<128x128xbf16>
        %38 = vector.shape_cast %33 : vector<128x128xbf16> to vector<1x128x128xbf16>
        tpu.vector_store %arg9[%34, %35, %c0_19], %38 {strides = array<i32>} : memref<1x128x128xbf16, #tpu.memory_space<vmem>>, vector<1x128x128xbf16>,
      } else {
      }
      %28 = arith.extui %2 : i1 to i32
      %c0_i32_16 = arith.constant 0 : i32
      %29 = arith.cmpi ne, %28, %c0_i32_16 : i32
      scf.if %29 {
        %c0_17 = arith.constant 0 : index
        %c0_18 = arith.constant 0 : index
        %30 = vector.load %arg8[%c0_17, %c0_18] : memref<128x128xf32, #tpu.memory_space<vmem>>, vector<128x128xf32>
        tpu.vector_store %arg8[%c0_17, %c0_18], %24 {strides = array<i32>} : memref<128x128xf32, #tpu.memory_space<vmem>>, vector<128x128xf32>,
      } else {
      }
    } else {
    }
    return
  }
  func.func @transform_0(%arg0: i32, %arg1: i32) -> (i32, i32) {
    %c0_i32 = arith.constant 0 : i32
    %c0_i32_0 = arith.constant 0 : i32
    %c0_i32_1 = arith.constant 0 : i32
    return %c0_i32, %c0_i32_0 : i32, i32
  }
  func.func @transform_1(%arg0: i32, %arg1: i32) -> (i32, i32) {
    %c0_i32 = arith.constant 0 : i32
    %c0_i32_0 = arith.constant 0 : i32
    %c0_i32_1 = arith.constant 0 : i32
    return %c0_i32, %c0_i32_0 : i32, i32
  }
  func.func @transform_2(%arg0: i32, %arg1: i32) -> (i32, i32) {
    %c0_i32 = arith.constant 0 : i32
    %c0_i32_0 = arith.constant 0 : i32
    %c0_i32_1 = arith.constant 0 : i32
    return %c0_i32, %c0_i32_0 : i32, i32
  }
  func.func @transform_3(%arg0: i32, %arg1: i32) -> (i32, i32) {
    %c0_i32 = arith.constant 0 : i32
    %c0_i32_0 = arith.constant 0 : i32
    %c0_i32_1 = arith.constant 0 : i32
    return %c0_i32, %c0_i32_0 : i32, i32
  }
  func.func @transform_4(%arg0: i32, %arg1: i32) -> (i32, i32, i32) {
    %c1_i32 = arith.constant 1 : i32
    %0 = arith.subi %arg0, %c1_i32 : i32
    %c0_i32 = arith.constant 0 : i32
    %1 = arith.maxsi %0, %c0_i32 : i32
    %c0_i32_0 = arith.constant 0 : i32
    %c0_i32_1 = arith.constant 0 : i32
    %c0_i32_2 = arith.constant 0 : i32
    return %1, %c0_i32_0, %c0_i32_1 : i32, i32, i32
  }
  func.func @transform_5(%arg0: i32, %arg1: i32) -> (i32, i32, i32) {
    %c1_i32 = arith.constant 1 : i32
    %0 = arith.subi %arg0, %c1_i32 : i32
    %c0_i32 = arith.constant 0 : i32
    %1 = arith.maxsi %0, %c0_i32 : i32
    %c0_i32_0 = arith.constant 0 : i32
    %c0_i32_1 = arith.constant 0 : i32
    %c0_i32_2 = arith.constant 0 : i32
    return %1, %c0_i32_0, %c0_i32_1 : i32, i32, i32
  }
  func.func @transform_6(%arg0: i32, %arg1: i32) -> (i32, i32) {
    %c1_i32 = arith.constant 1 : i32
    %0 = arith.cmpi eq, %arg0, %c1_i32 : i32
    %c0_i32 = arith.constant 0 : i32
    %1 = arith.select %0, %arg1, %c0_i32 : i32
    %c0_i32_0 = arith.constant 0 : i32
    %c0_i32_1 = arith.constant 0 : i32
    return %1, %c0_i32_0 : i32, i32
  }
}

</mosaic_0001>

<llo_original>
// kernel: tpu_custom_call.1
$region0: #{tpu_custom_call.1}
  #allocation0 [shape = 'u32[]', space=smem, size = 0x4, offset = 0x4, fixed_abs, tag = 'smem constant byte address 0x4 - core index']
  #allocation1 [shape = 'u32[144,128]{1,0:T(1,128)}', space=vmem, size = 0x12000, scoped, tag = 'internal scratch']
  #allocation2 [shape = 'bf16[1,128,128]{2,1,0:T(16,128)(2,1)}', space=vmem, size = 0x8000, scoped, tag = 'scratch operand']
  %s0 = inlined_call_operand.hbm [shape: bf16[128,128], index: 0, kind: input, shape index: {}]
  %s1 = inlined_call_operand.hbm [shape: bf16[128,128], index: 1, kind: input, shape index: {}]
  %s2 = inlined_call_operand.hbm [shape: f32[128,128], index: 2, kind: input, shape index: {}]
  %s3 = inlined_call_operand.vmem [shape: f32[1,128], index: 3, kind: input, shape index: {}]
  %s4 = inlined_call_operand.hbm [shape: f32[1,128,128], index: 4, kind: input, shape index: {}]
  %s5 = inlined_call_operand.vmem [shape: f32[1,1,128], index: 5, kind: input, shape index: {}]
  %s6 = inlined_call_operand.hbm [shape: f32[128,128], index: 6, kind: output, shape index: {}]
  %s7 = sld [smem:[#allocation0]]
  $region97: #{tpu_custom_call.1} parent=0
    _
  %s9 = ssub.s32 1, %s7
  %s10 = scalar_select 0, %s9, %s7
  $region1: #{tpu_custom_call.1} parent=0
    #allocation3 [shape = 'u8[32768]{0}', space=vmem, size = 0x8000, scoped, tag = 'input window, operand 0, single buffered']
    #allocation4 [shape = 's32[2]{0}', space=sflag, size = 0x8, scoped, tag = 'scoped memory for tpu_custom_call.1']
    #allocation5 [shape = 's32[2]{0}', space=sflag, size = 0x8, scoped, tag = 'scoped memory for tpu_custom_call.1']
    #allocation6 [shape = 'u8[32768]{0}', space=vmem, size = 0x8000, scoped, tag = 'input window, operand 1, single buffered']
    #allocation7 [shape = 's32[1]{0}', space=sflag, size = 0x4, scoped, tag = 'scoped memory for tpu_custom_call.1']
    #allocation8 [shape = 'u8[65536]{0}', space=vmem, size = 0x10000, scoped, tag = 'input window, operand 2, single buffered']
    #allocation9 [shape = 'u8[131072]{0}', space=vmem, size = 0x20000, scoped, tag = 'input window, operand 4']
    #allocation10 [shape = 's32[2]{0}', space=sflag, size = 0x8, scoped, tag = 'scoped memory for tpu_custom_call.1']
    #allocation11 [shape = 'u8[131072]{0}', space=vmem, size = 0x20000, scoped, tag = 'output window, operand 0']
    %11 = vsyncpa [#allocation4], 0
    %12 = vsyncpa [#allocation7], 0
    %13 = vsyncpa [#allocation10], 0
    %s14 = scalar_lea.sflag [#allocation10], 1
    %15 = vsyncpa %s14, 0
    %16 = vsyncpa [#allocation5], 0
    %s17 = scalar_lea.sflag [#allocation5], 1
    %18 = vsyncpa %s17, 0
    loop: start=0, step=1, limit=4
    $region2: #{tpu_custom_call.1} parent=1 // loop_pre_header
      _
    $region3: #{tpu_custom_call.1} parent=1 // loop_header
      %s20 = sphi 0, %s24
      %p21 = scmp.ge.s32.totalorder %s20, 4
      %s27 = sphi 0, %s39
      %s28 = sphi 0, %s35
      %s29 = sphi 0, %s27
      %s30 = sphi 0, %s28
      %s31 = sphi 0, %s29
      %s32 = sphi 0, %s30
      %s40 = sphi 0, %s40
      %s42 = sphi 0, %s40
      %s43 = sphi 0, %s42
      %s57 = sphi 0, %s43
      %s61 = sphi 0, %s61
      %s63 = sphi 0, %s61
      %s64 = sphi 0, %s63
      %s78 = sphi 0, %s64
      %s82 = sphi 0, %s82
      %s84 = sphi 0, %s82
      %s85 = sphi 0, %s84
      %s99 = sphi 0, %s85
      %s103 = sphi 0, %s103
      %s105 = sphi 0, %s103
      %s106 = sphi 0, %s105
      %s120 = sphi 0, %s106
      %s132 = sphi 0, %s134
      %s135 = sphi 0, %s132
      %s136 = sphi 0, %s135
      %s152 = sphi 0, %s136
      %s164 = sphi 0, %s166
      %s167 = sphi 0, %s164
      %s168 = sphi 0, %s167
      %s184 = sphi 0, %s168
      %s194 = sphi 0, %s196
      %s197 = sphi 0, %s194
      %s198 = sphi 0, %s197
      %s214 = sphi 0, %s198
    $region4: #{tpu_custom_call.1} parent=1 // loop_header_branch
      %23 = sbr.rel (%p21) target = $region8
    $region5: #{tpu_custom_call.1} parent=1 // loop_body
      %s25 = ssub.s32 %s20, 1
      %s26 = ssub.s32 %s20, 2
      %s33 = sadd.s32 1, %s28
      %p34 = scmp.ge.s32.totalorder %s33, 1
      %s35 = scalar_select %p34, 0, %s33
      %s36 = sadd.s32 1, %s27
      %s37 = scalar_select %p34, %s36, %s27
      %p38 = scmp.ge.s32.totalorder %s37, 2
      %s39 = scalar_select %p38, 0, %s37
      %s41 = sadd.s32 %s40, 1
      %p44 = scmp.eq.s32.totalorder %s20, 1
      %p45 = scmp.ne.s32.totalorder %s40, %s42
      %p46 = scmp.eq.s32.totalorder %s20, 0
      %p47 = por %p45, %p46
      %p48 = scmp.ne.s32.totalorder %s40, %s42
      %p49 = scmp.eq.s32.totalorder %s25, 1
      %p50 = por %p48, %p49
      %p51 = scmp.ne.s32.totalorder %s42, %s43
      %p52 = scmp.eq.s32.totalorder %s25, 0
      %p53 = por %p51, %p52
      %p54 = scmp.ne.s32.totalorder %s42, %s43
      %p55 = scmp.eq.s32.totalorder %s26, 1
      %p56 = por %p54, %p55
      %p58 = scmp.ne.s32.totalorder %s43, %s57
      %p59 = scmp.eq.s32.totalorder %s26, 0
      %p60 = por %p58, %p59
      %s62 = sadd.s32 %s61, 1
      %p65 = scmp.eq.s32.totalorder %s20, 1
      %p66 = scmp.ne.s32.totalorder %s61, %s63
      %p67 = scmp.eq.s32.totalorder %s20, 0
      %p68 = por %p66, %p67
      %p69 = scmp.ne.s32.totalorder %s61, %s63
      %p70 = scmp.eq.s32.totalorder %s25, 1
      %p71 = por %p69, %p70
      %p72 = scmp.ne.s32.totalorder %s63, %s64
      %p73 = scmp.eq.s32.totalorder %s25, 0
      %p74 = por %p72, %p73
      %p75 = scmp.ne.s32.totalorder %s63, %s64
      %p76 = scmp.eq.s32.totalorder %s26, 1
      %p77 = por %p75, %p76
      %p79 = scmp.ne.s32.totalorder %s64, %s78
      %p80 = scmp.eq.s32.totalorder %s26, 0
      %p81 = por %p79, %p80
      %s83 = sadd.s32 %s82, 1
      %p86 = scmp.eq.s32.totalorder %s20, 1
      %p87 = scmp.ne.s32.totalorder %s82, %s84
      %p88 = scmp.eq.s32.totalorder %s20, 0
      %p89 = por %p87, %p88
      %p90 = scmp.ne.s32.totalorder %s82, %s84
      %p91 = scmp.eq.s32.totalorder %s25, 1
      %p92 = por %p90, %p91
      %p93 = scmp.ne.s32.totalorder %s84, %s85
      %p94 = scmp.eq.s32.totalorder %s25, 0
      %p95 = por %p93, %p94
      %p96 = scmp.ne.s32.totalorder %s84, %s85
      %p97 = scmp.eq.s32.totalorder %s26, 1
      %p98 = por %p96, %p97
      %p100 = scmp.ne.s32.totalorder %s85, %s99
      %p101 = scmp.eq.s32.totalorder %s26, 0
      %p102 = por %p100, %p101
      %s104 = sadd.s32 %s103, 1
      %p107 = scmp.eq.s32.totalorder %s20, 1
      %p108 = scmp.ne.s32.totalorder %s103, %s105
      %p109 = scmp.eq.s32.totalorder %s20, 0
      %p110 = por %p108, %p109
      %p111 = scmp.ne.s32.totalorder %s103, %s105
      %p112 = scmp.eq.s32.totalorder %s25, 1
      %p113 = por %p111, %p112
      %p114 = scmp.ne.s32.totalorder %s105, %s106
      %p115 = scmp.eq.s32.totalorder %s25, 0
      %p116 = por %p114, %p115
      %p117 = scmp.ne.s32.totalorder %s105, %s106
      %p118 = scmp.eq.s32.totalorder %s26, 1
      %p119 = por %p117, %p118
      %p121 = scmp.ne.s32.totalorder %s106, %s120
      %p122 = scmp.eq.s32.totalorder %s26, 0
      %p123 = por %p121, %p122
      %s124 = ssub.s32 %s27, 1
      %p125 = scmp.gt.s32.totalorder %s124, 0
      %s126 = scalar_select %p125, %s124, 0
      %s127 = ssub.s32 %s39, 1
      %p128 = scmp.gt.s32.totalorder %s127, 0
      %s129 = scalar_select %p128, %s127, 0
      %s130 = ssub.s32 %s126, %s129
      %p131 = scmp.eq.s32.totalorder %s130, 0
      %s133 = sadd.s32 %s132, 1
      %s134 = scalar_select %p131, %s132, %s133
      %p137 = pneg %p131
      %p138 = scmp.eq.s32.totalorder %s20, 1
      %p139 = por %p137, %p138
      %p140 = scmp.ne.s32.totalorder %s132, %s135
      %p141 = scmp.eq.s32.totalorder %s20, 0
      %p142 = por %p140, %p141
      %p143 = scmp.ne.s32.totalorder %s132, %s135
      %p144 = scmp.eq.s32.totalorder %s25, 1
      %p145 = por %p143, %p144
      %p146 = scmp.ne.s32.totalorder %s135, %s136
      %p147 = scmp.eq.s32.totalorder %s25, 0
      %p148 = por %p146, %p147
      %p149 = scmp.ne.s32.totalorder %s135, %s136
      %p150 = scmp.eq.s32.totalorder %s26, 1
      %p151 = por %p149, %p150
      %p153 = scmp.ne.s32.totalorder %s136, %s152
      %p154 = scmp.eq.s32.totalorder %s26, 0
      %p155 = por %p153, %p154
      %s156 = ssub.s32 %s27, 1
      %p157 = scmp.gt.s32.totalorder %s156, 0
      %s158 = scalar_select %p157, %s156, 0
      %s159 = ssub.s32 %s39, 1
      %p160 = scmp.gt.s32.totalorder %s159, 0
      %s161 = scalar_select %p160, %s159, 0
      %s162 = ssub.s32 %s158, %s161
      %p163 = scmp.eq.s32.totalorder %s162, 0
      %s165 = sadd.s32 %s164, 1
      %s166 = scalar_select %p163, %s164, %s165
      %p169 = pneg %p163
      %p170 = scmp.eq.s32.totalorder %s20, 1
      %p171 = por %p169, %p170
      %p172 = scmp.ne.s32.totalorder %s164, %s167
      %p173 = scmp.eq.s32.totalorder %s20, 0
      %p174 = por %p172, %p173
      %p175 = scmp.ne.s32.totalorder %s164, %s167
      %p176 = scmp.eq.s32.totalorder %s25, 1
      %p177 = por %p175, %p176
      %p178 = scmp.ne.s32.totalorder %s167, %s168
      %p179 = scmp.eq.s32.totalorder %s25, 0
      %p180 = por %p178, %p179
      %p181 = scmp.ne.s32.totalorder %s167, %s168
      %p182 = scmp.eq.s32.totalorder %s26, 1
      %p183 = por %p181, %p182
      %p185 = scmp.ne.s32.totalorder %s168, %s184
      %p186 = scmp.eq.s32.totalorder %s26, 0
      %p187 = por %p185, %p186
      %p188 = scmp.eq.s32.totalorder %s27, 1
      %s189 = scalar_select %p188, %s28, 0
      %p190 = scmp.eq.s32.totalorder %s39, 1
      %s191 = scalar_select %p190, %s35, 0
      %s192 = ssub.s32 %s189, %s191
      %p193 = scmp.eq.s32.totalorder %s192, 0
      %s195 = sadd.s32 %s194, 1
      %s196 = scalar_select %p193, %s194, %s195
      %p199 = pneg %p193
      %p200 = scmp.eq.s32.totalorder %s20, 1
      %p201 = por %p199, %p200
      %p202 = scmp.ne.s32.totalorder %s194, %s197
      %p203 = scmp.eq.s32.totalorder %s20, 0
      %p204 = por %p202, %p203
      %p205 = scmp.ne.s32.totalorder %s194, %s197
      %p206 = scmp.eq.s32.totalorder %s25, 1
      %p207 = por %p205, %p206
      %p208 = scmp.ne.s32.totalorder %s197, %s198
      %p209 = scmp.eq.s32.totalorder %s25, 0
      %p210 = por %p208, %p209
      %p211 = scmp.ne.s32.totalorder %s197, %s198
      %p212 = scmp.eq.s32.totalorder %s26, 1
      %p213 = por %p211, %p212
      %p215 = scmp.ne.s32.totalorder %s198, %s214
      %p216 = scmp.eq.s32.totalorder %s26, 0
      %p217 = por %p215, %p216
      %p218 = scmp.le.s32.totalorder 1, %s20
      %p219 = scmp.lt.s32.totalorder %s20, 3
      %p220 = pnand %p218, %p219
      %p221 = pneg %p220
      // Predicated region
      $region9: #{tpu_custom_call.1} parent=5 // pred_check
        _
      $region10: #{tpu_custom_call.1} parent=5 // pred_check_branch
        %223 = sbr.rel (%p220) target = $region12
      $region11: #{tpu_custom_call.1} parent=5 // pred_region
        %s224 = ssub.s32 %s20, 1
        // Predicated region
        $region13: #{tpu_custom_call.1} parent=11 // pred_check
          %p225 = pneg %p53
        $region14: #{tpu_custom_call.1} parent=11 // pred_check_branch
          %227 = sbr.rel (%p225) target = $region16
        $region15: #{tpu_custom_call.1} parent=11 // pred_region
          %s229 = ssub.s32 1024, 1024
          %230 = vsyncadd [#allocation4], %s229
          %s231 = sshll.u32 [#allocation3], 4
          %s232 = int_to_ptr.vmem [resolvable:$true] %s231
          %237 = dma.hbm_to_vmem [thread:$0]  %s0, 1024, %s232, [#allocation4], 64, 64, 4
        $region16: #{tpu_custom_call.1} parent=11 // pred_fallthru
          _
        // Predicated region
        $region17: #{tpu_custom_call.1} parent=11 // pred_check
          %p238 = pneg %p74
        $region18: #{tpu_custom_call.1} parent=11 // pred_check_branch
          %240 = sbr.rel (%p238) target = $region20
        $region19: #{tpu_custom_call.1} parent=11 // pred_region
          %s242 = ssub.s32 1024, 1024
          %243 = vsyncadd [#allocation7], %s242
          %s244 = sshll.u32 [#allocation6], 4
          %s245 = int_to_ptr.vmem [resolvable:$true] %s244
          %250 = dma.hbm_to_vmem [thread:$0]  %s1, 1024, %s245, [#allocation7], 64, 64, 4
        $region20: #{tpu_custom_call.1} parent=11 // pred_fallthru
          _
        // Predicated region
        $region21: #{tpu_custom_call.1} parent=11 // pred_check
          %p251 = pneg %p95
        $region22: #{tpu_custom_call.1} parent=11 // pred_check_branch
          %253 = sbr.rel (%p251) target = $region24
        $region23: #{tpu_custom_call.1} parent=11 // pred_region
          %s255 = ssub.s32 2048, 2048
          %256 = vsyncadd [#allocation7], %s255
          %s257 = sshll.u32 [#allocation8], 4
          %s258 = int_to_ptr.vmem [resolvable:$true] %s257
          %263 = dma.hbm_to_vmem [thread:$0]  %s2, 2048, %s258, [#allocation7], 128, 128, 8
        $region24: #{tpu_custom_call.1} parent=11 // pred_fallthru
          _
        // Predicated region
        $region25: #{tpu_custom_call.1} parent=11 // pred_check
          %p264 = pneg %p116
        $region26: #{tpu_custom_call.1} parent=11 // pred_check_branch
          %266 = sbr.rel (%p264) target = $region28
        $region27: #{tpu_custom_call.1} parent=11 // pred_region
          _
        $region28: #{tpu_custom_call.1} parent=11 // pred_fallthru
          _
      $region12: #{tpu_custom_call.1} parent=5 // pred_fallthru
        _
      %p267 = scmp.lt.s32.totalorder %s20, 2
      // Predicated region
      $region29: #{tpu_custom_call.1} parent=5 // pred_check
        %p268 = pneg %p267
      $region30: #{tpu_custom_call.1} parent=5 // pred_check_branch
        %270 = sbr.rel (%p268) target = $region32
      $region31: #{tpu_custom_call.1} parent=5 // pred_region
        // Predicated region
        $region33: #{tpu_custom_call.1} parent=31 // pred_check
          %p271 = pneg %p142
        $region34: #{tpu_custom_call.1} parent=31 // pred_check_branch
          %273 = sbr.rel (%p271) target = $region36
        $region35: #{tpu_custom_call.1} parent=31 // pred_region
          %s274 = sand.u32 %s132, 1
          %s275 = scalar_lea.sflag [#allocation10], %s274
          %s276 = sand.u32 %s132, 1
          %s277 = smul.addr %s276, 128
          %s278 = scalar_lea.vmem [#allocation9], %s277
          %s279 = ssub.s32 %s27, 1
          %p280 = scmp.gt.s32.totalorder %s279, 0
          %s281 = scalar_select %p280, %s279, 0
          %s283 = ssub.s32 2048, 2048
          %284 = vsyncadd %s275, %s283
          %s285 = smul.addr %s281, 16
          %s286 = smul.addr %s285, 128
          %s287 = scalar_lea.hbm %s4, %s286
          %s288 = sshll.u32 %s278, 4
          %s289 = int_to_ptr.vmem [resolvable:$true] %s288
          %294 = dma.hbm_to_vmem [thread:$0]  %s287, 2048, %s289, %s275, 128, 128, 8
        $region36: #{tpu_custom_call.1} parent=31 // pred_fallthru
          _
        // Predicated region
        $region37: #{tpu_custom_call.1} parent=31 // pred_check
          %p295 = pneg %p174
        $region38: #{tpu_custom_call.1} parent=31 // pred_check_branch
          %297 = sbr.rel (%p295) target = $region40
        $region39: #{tpu_custom_call.1} parent=31 // pred_region
          %s298 = ssub.s32 %s27, 1
          %p299 = scmp.gt.s32.totalorder %s298, 0
          %s300 = scalar_select %p299, %s298, 0
          %p301 = scmp.lt.s32.totalorder %s300, 0
          %s302 = scalar_select %p301, %s300, 0
          %s303 = scalar_lea.vmem %s5, %s302
          %s304 = ssub.s32 %s27, 1
          %p305 = scmp.gt.s32.totalorder %s304, 0
          %s306 = scalar_select %p305, %s304, 0
        $region40: #{tpu_custom_call.1} parent=31 // pred_fallthru
          _
      $region32: #{tpu_custom_call.1} parent=5 // pred_fallthru
        _
      %p307 = scmp.le.s32.totalorder 1, %s20
      %p308 = scmp.lt.s32.totalorder %s20, 3
      %p309 = pnand %p307, %p308
      %p310 = pneg %p309
      // Predicated region
      $region41: #{tpu_custom_call.1} parent=5 // pred_check
        _
      $region42: #{tpu_custom_call.1} parent=5 // pred_check_branch
        %312 = sbr.rel (%p309) target = $region44
      $region43: #{tpu_custom_call.1} parent=5 // pred_region
        %s313 = ssub.s32 %s20, 1
        // Predicated region
        $region45: #{tpu_custom_call.1} parent=43 // pred_check
          %p314 = pneg %p53
        $region46: #{tpu_custom_call.1} parent=43 // pred_check_branch
          %316 = sbr.rel (%p314) target = $region48
        $region47: #{tpu_custom_call.1} parent=43 // pred_region
          %317 = dma.done [#allocation4], 1024
        $region48: #{tpu_custom_call.1} parent=43 // pred_fallthru
          _
        // Predicated region
        $region49: #{tpu_custom_call.1} parent=43 // pred_check
          %p318 = pneg %p74
        $region50: #{tpu_custom_call.1} parent=43 // pred_check_branch
          %320 = sbr.rel (%p318) target = $region52
        $region51: #{tpu_custom_call.1} parent=43 // pred_region
          %321 = dma.done [#allocation7], 1024
        $region52: #{tpu_custom_call.1} parent=43 // pred_fallthru
          _
        // Predicated region
        $region53: #{tpu_custom_call.1} parent=43 // pred_check
          %p322 = pneg %p95
        $region54: #{tpu_custom_call.1} parent=43 // pred_check_branch
          %324 = sbr.rel (%p322) target = $region56
        $region55: #{tpu_custom_call.1} parent=43 // pred_region
          %325 = dma.done [#allocation7], 2048
        $region56: #{tpu_custom_call.1} parent=43 // pred_fallthru
          _
        %s326 = sand.u32 %s135, 1
        %s327 = scalar_lea.sflag [#allocation10], %s326
        %s328 = sand.u32 %s135, 1
        %s329 = smul.addr %s328, 128
        %s330 = scalar_lea.vmem [#allocation9], %s329
        // Predicated region
        $region57: #{tpu_custom_call.1} parent=43 // pred_check
          %p331 = pneg %p148
        $region58: #{tpu_custom_call.1} parent=43 // pred_check_branch
          %333 = sbr.rel (%p331) target = $region60
        $region59: #{tpu_custom_call.1} parent=43 // pred_region
          %334 = dma.done %s327, 2048
        $region60: #{tpu_custom_call.1} parent=43 // pred_fallthru
          _
        %p335 = pneg %p53
        %p336 = pneg %p50
        %p337 = pneg %p74
        %p338 = pneg %p71
        %p339 = pneg %p95
        %p340 = pneg %p92
        %p341 = pneg %p116
        %p342 = pneg %p113
        %s343 = sand.u32 %s135, 1
        %s344 = scalar_lea.sflag [#allocation10], %s343
        %s345 = sand.u32 %s135, 1
        %s346 = smul.addr %s345, 128
        %s347 = scalar_lea.vmem [#allocation9], %s346
        %p348 = pneg %p148
        %p349 = pneg %p145
        %s350 = ssub.s32 %s29, 1
        %p351 = scmp.gt.s32.totalorder %s350, 0
        %s352 = scalar_select %p351, %s350, 0
        %p353 = scmp.lt.s32.totalorder %s352, 0
        %s354 = scalar_select %p353, %s352, 0
        %s355 = scalar_lea.vmem %s5, %s354
        %p356 = pneg %p180
        %p357 = pneg %p177
        %p358 = pneg %p210
        %p359 = pneg %p207
        %s360 = sand.u32 %s197, 1
        %s361 = scalar_lea.sflag [#allocation5], %s360
        %s362 = sand.u32 %s197, 1
        %s363 = smul.addr %s362, 128
        %s364 = scalar_lea.vmem [#allocation11], %s363
        %s365 = ssub.s32 %s29, 1
        %p366 = scmp.gt.s32.totalorder %s365, 0
        %s367 = scalar_select %p366, %s365, 0
        %s368 = ssub.s32 %s29, 1
        %p369 = scmp.gt.s32.totalorder %s368, 0
        %s370 = scalar_select %p369, %s368, 0
        %p371 = scmp.lt.s32.totalorder %s370, 0
        %s372 = scalar_select %p371, %s370, 0
        %s373 = scalar_lea.vmem %s5, %s372
        %s374 = ssub.s32 %s29, 1
        %p375 = scmp.gt.s32.totalorder %s374, 0
        %s376 = scalar_select %p375, %s374, 0
        %p377 = scmp.eq.s32.totalorder %s29, 1
        %s378 = scalar_select %p377, %s30, 0
        %s379 = smul.u32 16, %s378
        %s381 = smul.u32 %s30, 128
        %p382 = scmp.eq.s32.totalorder %s29, 1
        %s383 = sshra.s32 %s381, 3
        %s384 = sand.u32 %s381, 7
        %s385 = smul.addr %s383, 4
        %s386 = scalar_lea.vmem [#allocation3], %s385
        %v387 = vld [vmem:[%s386] sm:$0xf]
        %v388 = vld [vmem:[%s386 + $0x4] sm:$0xf]
        %v389 = vld [vmem:[%s386 + $0x8] sm:$0xf]
        %v390 = vld [vmem:[%s386 + $0xc] sm:$0xf]
        %v391 = vld [vmem:[%s386 + $0x10] sm:$0xf]
        %v392 = vld [vmem:[%s386 + $0x14] sm:$0xf]
        %v393 = vld [vmem:[%s386 + $0x18] sm:$0xf]
        %v394 = vld [vmem:[%s386 + $0x1c] sm:$0xf]
        %v395 = vld [vmem:[%s386 + $0x20] sm:$0xf]
        %v396 = vld [vmem:[%s386 + $0x24] sm:$0xf]
        %v397 = vld [vmem:[%s386 + $0x28] sm:$0xf]
        %v398 = vld [vmem:[%s386 + $0x2c] sm:$0xf]
        %v399 = vld [vmem:[%s386 + $0x30] sm:$0xf]
        %v400 = vld [vmem:[%s386 + $0x34] sm:$0xf]
        %v401 = vld [vmem:[%s386 + $0x38] sm:$0xf]
        %v402 = vld [vmem:[%s386 + $0x3c] sm:$0xf]
        %p403 = scmp.eq.s32.totalorder %s29, 0
        // Predicated region
        $region61: #{tpu_custom_call.1} parent=43 // pred_check
          %p404 = pneg %p403
        $region62: #{tpu_custom_call.1} parent=43 // pred_check_branch
          %406 = sbr.rel (%p404) target = $region64
        $region63: #{tpu_custom_call.1} parent=43 // pred_region
          %v407 = vld [vmem:[#allocation6] sm:$0xf]
          %v408 = vld [vmem:[#allocation6 + $0x4] sm:$0xf]
          %v409 = vld [vmem:[#allocation6 + $0x8] sm:$0xf]
          %v410 = vld [vmem:[#allocation6 + $0xc] sm:$0xf]
          %v411 = vld [vmem:[#allocation6 + $0x10] sm:$0xf]
          %v412 = vld [vmem:[#allocation6 + $0x14] sm:$0xf]
          %v413 = vld [vmem:[#allocation6 + $0x18] sm:$0xf]
          %v414 = vld [vmem:[#allocation6 + $0x1c] sm:$0xf]
          %v415 = vld [vmem:[#allocation6 + $0x20] sm:$0xf]
          %v416 = vld [vmem:[#allocation6 + $0x24] sm:$0xf]
          %v417 = vld [vmem:[#allocation6 + $0x28] sm:$0xf]
          %v418 = vld [vmem:[#allocation6 + $0x2c] sm:$0xf]
          %v419 = vld [vmem:[#allocation6 + $0x30] sm:$0xf]
          %v420 = vld [vmem:[#allocation6 + $0x34] sm:$0xf]
          %v421 = vld [vmem:[#allocation6 + $0x38] sm:$0xf]
          %v422 = vld [vmem:[#allocation6 + $0x3c] sm:$0xf]
          %v439 = vunpack.c.l.b16 %v387
          %v440 = vunpack.c.l.b16 %v388
          %v441 = vunpack.c.l.b16 %v389
          %v442 = vunpack.c.l.b16 %v390
          %v443 = vunpack.c.l.b16 %v391
          %v444 = vunpack.c.l.b16 %v392
          %v445 = vunpack.c.l.b16 %v393
          %v446 = vunpack.c.l.b16 %v394
          %v447 = vunpack.c.l.b16 %v395
          %v448 = vunpack.c.l.b16 %v396
          %v449 = vunpack.c.l.b16 %v397
          %v450 = vunpack.c.l.b16 %v398
          %v451 = vunpack.c.l.b16 %v399
          %v452 = vunpack.c.l.b16 %v400
          %v453 = vunpack.c.l.b16 %v401
          %v454 = vunpack.c.l.b16 %v402
          %v455 = vpack.c.b16 %v440, %v439
          %v456 = vpack.c.b16 %v442, %v441
          %v457 = vpack.c.b16 %v444, %v443
          %v458 = vpack.c.b16 %v446, %v445
          %v459 = vpack.c.b16 %v448, %v447
          %v460 = vpack.c.b16 %v450, %v449
          %v461 = vpack.c.b16 %v452, %v451
          %v462 = vpack.c.b16 %v454, %v453
          %v487 = vunpack.c.l.b16 %v407
          %v488 = vunpack.c.l.b16 %v408
          %v489 = vunpack.c.l.b16 %v409
          %v490 = vunpack.c.l.b16 %v410
          %v491 = vunpack.c.l.b16 %v411
          %v492 = vunpack.c.l.b16 %v412
          %v493 = vunpack.c.l.b16 %v413
          %v494 = vunpack.c.l.b16 %v414
          %v495 = vunpack.c.l.b16 %v415
          %v496 = vunpack.c.l.b16 %v416
          %v497 = vunpack.c.l.b16 %v417
          %v498 = vunpack.c.l.b16 %v418
          %v499 = vunpack.c.l.b16 %v419
          %v500 = vunpack.c.l.b16 %v420
          %v501 = vunpack.c.l.b16 %v421
          %v502 = vunpack.c.l.b16 %v422
          %v503 = vpack.c.b16 %v488, %v487
          %v504 = vpack.c.b16 %v490, %v489
          %v505 = vpack.c.b16 %v492, %v491
          %v506 = vpack.c.b16 %v494, %v493
          %v507 = vpack.c.b16 %v496, %v495
          %v508 = vpack.c.b16 %v498, %v497
          %v509 = vpack.c.b16 %v500, %v499
          %v510 = vpack.c.b16 %v502, %v501
          %519 = vmatprep.subr.bf16.mxu0 0
          %520 = vmatpush1.bf16.msra.mxu0 %v503
          %521 = vmatprep.subr.bf16.mxu0 0
          %522 = vmatpush1.bf16.msra.mxu0 %v504
          %523 = vmatprep.subr.bf16.mxu0 0
          %524 = vmatpush1.bf16.msra.mxu0 %v505
          %525 = vmatprep.subr.bf16.mxu0 0
          %526 = vmatpush1.bf16.msra.mxu0 %v506
          %527 = vmatprep.subr.bf16.mxu0 0
          %528 = vmatpush1.bf16.msra.mxu0 %v507
          %529 = vmatprep.subr.bf16.mxu0 0
          %530 = vmatpush1.bf16.msra.mxu0 %v508
          %531 = vmatprep.subr.bf16.mxu0 0
          %532 = vmatpush1.bf16.msra.mxu0 %v509
          %533 = vmatprep.subr.bf16.mxu0 0
          %534 = vmatpush1.bf16.msra.mxu0 %v510
          %535 = vmatprep.subr.bf16.mxu0 0
          %536 = vmatpush1.bf16.msra.mxu0 0
          %537 = vmatprep.subr.bf16.mxu0 0
          %538 = vmatpush1.bf16.msra.mxu0 0
          %539 = vmatprep.subr.bf16.mxu0 0
          %540 = vmatpush1.bf16.msra.mxu0 0
          %541 = vmatprep.subr.bf16.mxu0 0
          %542 = vmatpush1.bf16.msra.mxu0 0
          %543 = vmatprep.subr.bf16.mxu0 0
          %544 = vmatpush1.bf16.msra.mxu0 0
          %545 = vmatprep.subr.bf16.mxu0 0
          %546 = vmatpush1.bf16.msra.mxu0 0
          %547 = vmatprep.subr.bf16.mxu0 0
          %548 = vmatpush1.bf16.msra.mxu0 0
          %549 = vmatprep.subr.bf16.mxu0 0
          %550 = vmatpush1.bf16.msra.mxu0 0
          %551 = vmatprep.mubr.bf16.mxu0 0
          %552 = vmatmul.mubr.bf16.gmra.mrb[0].mxu0 %v455
          %v553 = vpop.f32.mrb[0].mxu0
          %v554 = vadd.f32 0.0, %v553
          %v555 = vpop.f32.mrb[0].mxu0
          %v556 = vpop.f32.mrb[0].mxu0
          %v557 = vadd.f32 0.0, %v556
          %v558 = vpop.f32.mrb[0].mxu0
          %559 = vmatprep.mubr.bf16.mxu0 0
          %560 = vmatmul.mubr.bf16.gmra.mrb[0].mxu0 %v456
          %v561 = vpop.f32.mrb[0].mxu0
          %v562 = vadd.f32 0.0, %v561
          %v563 = vpop.f32.mrb[0].mxu0
          %v564 = vpop.f32.mrb[0].mxu0
          %v565 = vadd.f32 0.0, %v564
          %v566 = vpop.f32.mrb[0].mxu0
          %567 = vmatprep.mubr.bf16.mxu0 0
          %568 = vmatmul.mubr.bf16.gmra.mrb[0].mxu0 %v457
          %v569 = vpop.f32.mrb[0].mxu0
          %v570 = vadd.f32 0.0, %v569
          %v571 = vpop.f32.mrb[0].mxu0
          %v572 = vpop.f32.mrb[0].mxu0
          %v573 = vadd.f32 0.0, %v572
          %v574 = vpop.f32.mrb[0].mxu0
          %575 = vmatprep.mubr.bf16.mxu0 0
          %576 = vmatmul.mubr.bf16.gmra.mrb[0].mxu0 %v458
          %v577 = vpop.f32.mrb[0].mxu0
          %v578 = vadd.f32 0.0, %v577
          %v579 = vpop.f32.mrb[0].mxu0
          %v580 = vpop.f32.mrb[0].mxu0
          %v581 = vadd.f32 0.0, %v580
          %v582 = vpop.f32.mrb[0].mxu0
          %583 = vmatprep.mubr.bf16.mxu0 0
          %584 = vmatmul.mubr.bf16.gmra.mrb[0].mxu0 %v459
          %v585 = vpop.f32.mrb[0].mxu0
          %v586 = vadd.f32 0.0, %v585
          %v587 = vpop.f32.mrb[0].mxu0
          %v588 = vpop.f32.mrb[0].mxu0
          %v589 = vadd.f32 0.0, %v588
          %v590 = vpop.f32.mrb[0].mxu0
          %591 = vmatprep.mubr.bf16.mxu0 0
          %592 = vmatmul.mubr.bf16.gmra.mrb[0].mxu0 %v460
          %v593 = vpop.f32.mrb[0].mxu0
          %v594 = vadd.f32 0.0, %v593
          %v595 = vpop.f32.mrb[0].mxu0
          %v596 = vpop.f32.mrb[0].mxu0
          %v597 = vadd.f32 0.0, %v596
          %v598 = vpop.f32.mrb[0].mxu0
          %599 = vmatprep.mubr.bf16.mxu0 0
          %600 = vmatmul.mubr.bf16.gmra.mrb[0].mxu0 %v461
          %v601 = vpop.f32.mrb[0].mxu0
          %v602 = vadd.f32 0.0, %v601
          %v603 = vpop.f32.mrb[0].mxu0
          %v604 = vpop.f32.mrb[0].mxu0
          %v605 = vadd.f32 0.0, %v604
          %v606 = vpop.f32.mrb[0].mxu0
          %607 = vmatprep.mubr.bf16.mxu0 0
          %608 = vmatmul.mubr.bf16.gmra.mrb[0].mxu0 %v462
          %v609 = vpop.f32.mrb[0].mxu0
          %v610 = vadd.f32 0.0, %v609
          %v611 = vpop.f32.mrb[0].mxu0
          %v612 = vpop.f32.mrb[0].mxu0
          %v613 = vadd.f32 0.0, %v612
          %v614 = vpop.f32.mrb[0].mxu0
          %615 = vdwg.mxu0
          %v616 = vld [vmem:[#allocation8] sm:$0xff]
          %v617 = vld [vmem:[#allocation8 + $0x8] sm:$0xff]
          %v618 = vld [vmem:[#allocation8 + $0x10] sm:$0xff]
          %v619 = vld [vmem:[#allocation8 + $0x18] sm:$0xff]
          %v620 = vld [vmem:[#allocation8 + $0x20] sm:$0xff]
          %v621 = vld [vmem:[#allocation8 + $0x28] sm:$0xff]
          %v622 = vld [vmem:[#allocation8 + $0x30] sm:$0xff]
          %v623 = vld [vmem:[#allocation8 + $0x38] sm:$0xff]
          %v624 = vld [vmem:[#allocation8 + $0x40] sm:$0xff]
          %v625 = vld [vmem:[#allocation8 + $0x48] sm:$0xff]
          %v626 = vld [vmem:[#allocation8 + $0x50] sm:$0xff]
          %v627 = vld [vmem:[#allocation8 + $0x58] sm:$0xff]
          %v628 = vld [vmem:[#allocation8 + $0x60] sm:$0xff]
          %v629 = vld [vmem:[#allocation8 + $0x68] sm:$0xff]
          %v630 = vld [vmem:[#allocation8 + $0x70] sm:$0xff]
          %v631 = vld [vmem:[#allocation8 + $0x78] sm:$0xff]
          %v632 = vld [vmem:[%s3] sm:$0x1]
          %v634 = vlaneseq
          %v635 = vshrl.u32 %v634, 7
          %v636 = vsub.s32 0, %v635
          %v637 = vrot.slane %v632, %v636
          %639 = vmatprep.subr.mxu0 0.0
          %640 = vmatpush1.msra.mxu0 %v616
          %641 = vmatprep.subr.mxu0 0.0
          %642 = vmatpush1.msra.mxu0 %v617
          %643 = vmatprep.subr.mxu0 0.0
          %644 = vmatpush1.msra.mxu0 %v618
          %645 = vmatprep.subr.mxu0 0.0
          %646 = vmatpush1.msra.mxu0 %v619
          %647 = vmatprep.subr.mxu0 0.0
          %648 = vmatpush1.msra.mxu0 %v620
          %649 = vmatprep.subr.mxu0 0.0
          %650 = vmatpush1.msra.mxu0 %v621
          %651 = vmatprep.subr.mxu0 0.0
          %652 = vmatpush1.msra.mxu0 %v622
          %653 = vmatprep.subr.mxu0 0.0
          %654 = vmatpush1.msra.mxu0 %v623
          %655 = vmatprep.subr.mxu0 0.0
          %656 = vmatpush1.msra.mxu0 %v624
          %657 = vmatprep.subr.mxu0 0.0
          %658 = vmatpush1.msra.mxu0 %v625
          %659 = vmatprep.subr.mxu0 0.0
          %660 = vmatpush1.msra.mxu0 %v626
          %661 = vmatprep.subr.mxu0 0.0
          %662 = vmatpush1.msra.mxu0 %v627
          %663 = vmatprep.subr.mxu0 0.0
          %664 = vmatpush1.msra.mxu0 %v628
          %665 = vmatprep.subr.mxu0 0.0
          %666 = vmatpush1.msra.mxu0 %v629
          %667 = vmatprep.subr.mxu0 0.0
          %668 = vmatpush1.msra.mxu0 %v630
          %669 = vmatprep.subr.mxu0 0.0
          %670 = vmatpush1.msra.mxu0 %v631
          %671 = vmatprep.subr.mxu0 0.0
          %672 = vmatpush1.msra.mxu0 0.0
          %673 = vmatprep.subr.mxu0 0.0
          %674 = vmatpush1.msra.mxu0 0.0
          %675 = vmatprep.subr.mxu0 0.0
          %676 = vmatpush1.msra.mxu0 0.0
          %677 = vmatprep.subr.mxu0 0.0
          %678 = vmatpush1.msra.mxu0 0.0
          %679 = vmatprep.subr.mxu0 0.0
          %680 = vmatpush1.msra.mxu0 0.0
          %681 = vmatprep.subr.mxu0 0.0
          %682 = vmatpush1.msra.mxu0 0.0
          %683 = vmatprep.subr.mxu0 0.0
          %684 = vmatpush1.msra.mxu0 0.0
          %685 = vmatprep.subr.mxu0 0.0
          %686 = vmatpush1.msra.mxu0 0.0
          %687 = vmatprep.subr.mxu0 0.0
          %688 = vmatpush1.msra.mxu0 0.0
          %689 = vmatprep.subr.mxu0 0.0
          %690 = vmatpush1.msra.mxu0 0.0
          %691 = vmatprep.subr.mxu0 0.0
          %692 = vmatpush1.msra.mxu0 0.0
          %693 = vmatprep.subr.mxu0 0.0
          %694 = vmatpush1.msra.mxu0 0.0
          %695 = vmatprep.subr.mxu0 0.0
          %696 = vmatpush1.msra.mxu0 0.0
          %697 = vmatprep.subr.mxu0 0.0
          %698 = vmatpush1.msra.mxu0 0.0
          %699 = vmatprep.subr.mxu0 0.0
          %700 = vmatpush1.msra.mxu0 0.0
          %701 = vmatprep.subr.mxu0 0.0
          %702 = vmatpush1.msra.mxu0 0.0
          %703 = vmatprep.mubr.f32.mxu0 0.0
          %704 = vmatmul.mubr.f32.gmra.mrb[0].mxu0 %v554
          %v705 = vpop.f32.mrb[0].mxu0
          %v706 = vadd.f32 %v637, %v705
          %v707 = vpop.f32.mrb[0].mxu0
          %708 = vmatprep.mubr.f32.mxu0 0.0
          %709 = vmatmul.mubr.f32.gmra.mrb[0].mxu0 %v557
          %v710 = vpop.f32.mrb[0].mxu0
          %v711 = vadd.f32 %v637, %v710
          %v712 = vpop.f32.mrb[0].mxu0
          %713 = vmatprep.mubr.f32.mxu0 0.0
          %714 = vmatmul.mubr.f32.gmra.mrb[0].mxu0 %v562
          %v715 = vpop.f32.mrb[0].mxu0
          %v716 = vadd.f32 %v637, %v715
          %v717 = vpop.f32.mrb[0].mxu0
          %718 = vmatprep.mubr.f32.mxu0 0.0
          %719 = vmatmul.mubr.f32.gmra.mrb[0].mxu0 %v565
          %v720 = vpop.f32.mrb[0].mxu0
          %v721 = vadd.f32 %v637, %v720
          %v722 = vpop.f32.mrb[0].mxu0
          %723 = vmatprep.mubr.f32.mxu0 0.0
          %724 = vmatmul.mubr.f32.gmra.mrb[0].mxu0 %v570
          %v725 = vpop.f32.mrb[0].mxu0
          %v726 = vadd.f32 %v637, %v725
          %v727 = vpop.f32.mrb[0].mxu0
          %728 = vmatprep.mubr.f32.mxu0 0.0
          %729 = vmatmul.mubr.f32.gmra.mrb[0].mxu0 %v573
          %v730 = vpop.f32.mrb[0].mxu0
          %v731 = vadd.f32 %v637, %v730
          %v732 = vpop.f32.mrb[0].mxu0
          %733 = vmatprep.mubr.f32.mxu0 0.0
          %734 = vmatmul.mubr.f32.gmra.mrb[0].mxu0 %v578
          %v735 = vpop.f32.mrb[0].mxu0
          %v736 = vadd.f32 %v637, %v735
          %v737 = vpop.f32.mrb[0].mxu0
          %738 = vmatprep.mubr.f32.mxu0 0.0
          %739 = vmatmul.mubr.f32.gmra.mrb[0].mxu0 %v581
          %v740 = vpop.f32.mrb[0].mxu0
          %v741 = vadd.f32 %v637, %v740
          %v742 = vpop.f32.mrb[0].mxu0
          %743 = vmatprep.mubr.f32.mxu0 0.0
          %744 = vmatmul.mubr.f32.gmra.mrb[0].mxu0 %v586
          %v745 = vpop.f32.mrb[0].mxu0
          %v746 = vadd.f32 %v637, %v745
          %v747 = vpop.f32.mrb[0].mxu0
          %748 = vmatprep.mubr.f32.mxu0 0.0
          %749 = vmatmul.mubr.f32.gmra.mrb[0].mxu0 %v589
          %v750 = vpop.f32.mrb[0].mxu0
          %v751 = vadd.f32 %v637, %v750
          %v752 = vpop.f32.mrb[0].mxu0
          %753 = vmatprep.mubr.f32.mxu0 0.0
          %754 = vmatmul.mubr.f32.gmra.mrb[0].mxu0 %v594
          %v755 = vpop.f32.mrb[0].mxu0
          %v756 = vadd.f32 %v637, %v755
          %v757 = vpop.f32.mrb[0].mxu0
          %758 = vmatprep.mubr.f32.mxu0 0.0
          %759 = vmatmul.mubr.f32.gmra.mrb[0].mxu0 %v597
          %v760 = vpop.f32.mrb[0].mxu0
          %v761 = vadd.f32 %v637, %v760
          %v762 = vpop.f32.mrb[0].mxu0
          %763 = vmatprep.mubr.f32.mxu0 0.0
          %764 = vmatmul.mubr.f32.gmra.mrb[0].mxu0 %v602
          %v765 = vpop.f32.mrb[0].mxu0
          %v766 = vadd.f32 %v637, %v765
          %v767 = vpop.f32.mrb[0].mxu0
          %768 = vmatprep.mubr.f32.mxu0 0.0
          %769 = vmatmul.mubr.f32.gmra.mrb[0].mxu0 %v605
          %v770 = vpop.f32.mrb[0].mxu0
          %v771 = vadd.f32 %v637, %v770
          %v772 = vpop.f32.mrb[0].mxu0
          %773 = vmatprep.mubr.f32.mxu0 0.0
          %774 = vmatmul.mubr.f32.gmra.mrb[0].mxu0 %v610
          %v775 = vpop.f32.mrb[0].mxu0
          %v776 = vadd.f32 %v637, %v775
          %v777 = vpop.f32.mrb[0].mxu0
          %778 = vmatprep.mubr.f32.mxu0 0.0
          %779 = vmatmul.mubr.f32.gmra.mrb[0].mxu0 %v613
          %v780 = vpop.f32.mrb[0].mxu0
          %v781 = vadd.f32 %v637, %v780
          %v782 = vpop.f32.mrb[0].mxu0
          %783 = vdwg.mxu0
          %p784 = scmp.ne.s32.totalorder %s29, 1
          // Predicated region
          $region65: #{tpu_custom_call.1} parent=63 // pred_check
            %p785 = pneg %p784
          $region66: #{tpu_custom_call.1} parent=63 // pred_check_branch
            %787 = sbr.rel (%p785) target = $region68
          $region67: #{tpu_custom_call.1} parent=63 // pred_region
            %v788 = vmax.f32 %v706, 0.0
            %v789 = vmax.f32 %v711, 0.0
            %v790 = vmax.f32 %v716, 0.0
            %v791 = vmax.f32 %v721, 0.0
            %v792 = vmax.f32 %v726, 0.0
            %v793 = vmax.f32 %v731, 0.0
            %v794 = vmax.f32 %v736, 0.0
            %v795 = vmax.f32 %v741, 0.0
            %v796 = vmax.f32 %v746, 0.0
            %v797 = vmax.f32 %v751, 0.0
            %v798 = vmax.f32 %v756, 0.0
            %v799 = vmax.f32 %v761, 0.0
            %v800 = vmax.f32 %v766, 0.0
            %v801 = vmax.f32 %v771, 0.0
            %v802 = vmax.f32 %v776, 0.0
            %v803 = vmax.f32 %v781, 0.0
            %v804 = vpack.c.bf16 %v789, %v788
            %v805 = vpack.c.bf16 %v791, %v790
            %v806 = vpack.c.bf16 %v793, %v792
            %v807 = vpack.c.bf16 %v795, %v794
            %v808 = vpack.c.bf16 %v797, %v796
            %v809 = vpack.c.bf16 %v799, %v798
            %v810 = vpack.c.bf16 %v801, %v800
            %v811 = vpack.c.bf16 %v803, %v802
            %s812 = sshra.s32 %s381, 4
            %s813 = sand.u32 %s381, 15
            %s814 = smul.addr %s812, 8
            %s815 = scalar_lea.vmem [#allocation2], %s814
            %816 = vst [vmem:[%s815] sm:$0xff] %v804
            %817 = vst [vmem:[%s815 + $0x8] sm:$0xff] %v805
            %818 = vst [vmem:[%s815 + $0x10] sm:$0xff] %v806
            %819 = vst [vmem:[%s815 + $0x18] sm:$0xff] %v807
            %820 = vst [vmem:[%s815 + $0x20] sm:$0xff] %v808
            %821 = vst [vmem:[%s815 + $0x28] sm:$0xff] %v809
            %822 = vst [vmem:[%s815 + $0x30] sm:$0xff] %v810
            %823 = vst [vmem:[%s815 + $0x38] sm:$0xff] %v811
          $region68: #{tpu_custom_call.1} parent=63 // pred_fallthru
            _
          // Predicated region
          $region69: #{tpu_custom_call.1} parent=63 // pred_check
            %p824 = pneg %p382
          $region70: #{tpu_custom_call.1} parent=63 // pred_check_branch
            %826 = sbr.rel (%p824) target = $region72
          $region71: #{tpu_custom_call.1} parent=63 // pred_region
            %827 = vst [vmem:[%s364] sm:$0xff] %v706
            %828 = vst [vmem:[%s364 + $0x8] sm:$0xff] %v711
            %829 = vst [vmem:[%s364 + $0x10] sm:$0xff] %v716
            %830 = vst [vmem:[%s364 + $0x18] sm:$0xff] %v721
            %831 = vst [vmem:[%s364 + $0x20] sm:$0xff] %v726
            %832 = vst [vmem:[%s364 + $0x28] sm:$0xff] %v731
            %833 = vst [vmem:[%s364 + $0x30] sm:$0xff] %v736
            %834 = vst [vmem:[%s364 + $0x38] sm:$0xff] %v741
            %835 = vst [vmem:[%s364 + $0x40] sm:$0xff] %v746
            %836 = vst [vmem:[%s364 + $0x48] sm:$0xff] %v751
            %837 = vst [vmem:[%s364 + $0x50] sm:$0xff] %v756
            %838 = vst [vmem:[%s364 + $0x58] sm:$0xff] %v761
            %839 = vst [vmem:[%s364 + $0x60] sm:$0xff] %v766
            %840 = vst [vmem:[%s364 + $0x68] sm:$0xff] %v771
            %841 = vst [vmem:[%s364 + $0x70] sm:$0xff] %v776
            %842 = vst [vmem:[%s364 + $0x78] sm:$0xff] %v781
          $region72: #{tpu_custom_call.1} parent=63 // pred_fallthru
            _
        $region64: #{tpu_custom_call.1} parent=43 // pred_fallthru
          _
        %p843 = scmp.gt.s32.totalorder %s29, 0
        // Predicated region
        $region73: #{tpu_custom_call.1} parent=43 // pred_check
          %p844 = pneg %p843
        $region74: #{tpu_custom_call.1} parent=43 // pred_check_branch
          %846 = sbr.rel (%p844) target = $region76
        $region75: #{tpu_custom_call.1} parent=43 // pred_region
          %v847 = vld [vmem:[#allocation2] sm:$0xff]
          %v848 = vld [vmem:[#allocation2 + $0x8] sm:$0xff]
          %v849 = vld [vmem:[#allocation2 + $0x10] sm:$0xff]
          %v850 = vld [vmem:[#allocation2 + $0x18] sm:$0xff]
          %v851 = vld [vmem:[#allocation2 + $0x20] sm:$0xff]
          %v852 = vld [vmem:[#allocation2 + $0x28] sm:$0xff]
          %v853 = vld [vmem:[#allocation2 + $0x30] sm:$0xff]
          %v854 = vld [vmem:[#allocation2 + $0x38] sm:$0xff]
          %v871 = vunpack.c.l.b16 %v387
          %v872 = vunpack.c.l.b16 %v388
          %v873 = vunpack.c.l.b16 %v389
          %v874 = vunpack.c.l.b16 %v390
          %v875 = vunpack.c.l.b16 %v391
          %v876 = vunpack.c.l.b16 %v392
          %v877 = vunpack.c.l.b16 %v393
          %v878 = vunpack.c.l.b16 %v394
          %v879 = vunpack.c.l.b16 %v395
          %v880 = vunpack.c.l.b16 %v396
          %v881 = vunpack.c.l.b16 %v397
          %v882 = vunpack.c.l.b16 %v398
          %v883 = vunpack.c.l.b16 %v399
          %v884 = vunpack.c.l.b16 %v400
          %v885 = vunpack.c.l.b16 %v401
          %v886 = vunpack.c.l.b16 %v402
          %v887 = vpack.c.b16 %v872, %v871
          %v888 = vpack.c.b16 %v874, %v873
          %v889 = vpack.c.b16 %v876, %v875
          %v890 = vpack.c.b16 %v878, %v877
          %v891 = vpack.c.b16 %v880, %v879
          %v892 = vpack.c.b16 %v882, %v881
          %v893 = vpack.c.b16 %v884, %v883
          %v894 = vpack.c.b16 %v886, %v885
          %903 = vmatprep.subr.bf16.mxu0 0
          %904 = vmatpush1.bf16.msra.mxu0 %v847
          %905 = vmatprep.subr.bf16.mxu0 0
          %906 = vmatpush1.bf16.msra.mxu0 %v848
          %907 = vmatprep.subr.bf16.mxu0 0
          %908 = vmatpush1.bf16.msra.mxu0 %v849
          %909 = vmatprep.subr.bf16.mxu0 0
          %910 = vmatpush1.bf16.msra.mxu0 %v850
          %911 = vmatprep.subr.bf16.mxu0 0
          %912 = vmatpush1.bf16.msra.mxu0 %v851
          %913 = vmatprep.subr.bf16.mxu0 0
          %914 = vmatpush1.bf16.msra.mxu0 %v852
          %915 = vmatprep.subr.bf16.mxu0 0
          %916 = vmatpush1.bf16.msra.mxu0 %v853
          %917 = vmatprep.subr.bf16.mxu0 0
          %918 = vmatpush1.bf16.msra.mxu0 %v854
          %919 = vmatprep.subr.bf16.mxu0 0
          %920 = vmatpush1.bf16.msra.mxu0 0
          %921 = vmatprep.subr.bf16.mxu0 0
          %922 = vmatpush1.bf16.msra.mxu0 0
          %923 = vmatprep.subr.bf16.mxu0 0
          %924 = vmatpush1.bf16.msra.mxu0 0
          %925 = vmatprep.subr.bf16.mxu0 0
          %926 = vmatpush1.bf16.msra.mxu0 0
          %927 = vmatprep.subr.bf16.mxu0 0
          %928 = vmatpush1.bf16.msra.mxu0 0
          %929 = vmatprep.subr.bf16.mxu0 0
          %930 = vmatpush1.bf16.msra.mxu0 0
          %931 = vmatprep.subr.bf16.mxu0 0
          %932 = vmatpush1.bf16.msra.mxu0 0
          %933 = vmatprep.subr.bf16.mxu0 0
          %934 = vmatpush1.bf16.msra.mxu0 0
          %935 = vmatprep.mubr.bf16.mxu0 0
          %936 = vmatmul.mubr.bf16.gmra.mrb[0].mxu0 %v887
          %v937 = vpop.f32.mrb[0].mxu0
          %v938 = vadd.f32 0.0, %v937
          %v939 = vpop.f32.mrb[0].mxu0
          %v940 = vpop.f32.mrb[0].mxu0
          %v941 = vadd.f32 0.0, %v940
          %v942 = vpop.f32.mrb[0].mxu0
          %943 = vmatprep.mubr.bf16.mxu0 0
          %944 = vmatmul.mubr.bf16.gmra.mrb[0].mxu0 %v888
          %v945 = vpop.f32.mrb[0].mxu0
          %v946 = vadd.f32 0.0, %v945
          %v947 = vpop.f32.mrb[0].mxu0
          %v948 = vpop.f32.mrb[0].mxu0
          %v949 = vadd.f32 0.0, %v948
          %v950 = vpop.f32.mrb[0].mxu0
          %951 = vmatprep.mubr.bf16.mxu0 0
          %952 = vmatmul.mubr.bf16.gmra.mrb[0].mxu0 %v889
          %v953 = vpop.f32.mrb[0].mxu0
          %v954 = vadd.f32 0.0, %v953
          %v955 = vpop.f32.mrb[0].mxu0
          %v956 = vpop.f32.mrb[0].mxu0
          %v957 = vadd.f32 0.0, %v956
          %v958 = vpop.f32.mrb[0].mxu0
          %959 = vmatprep.mubr.bf16.mxu0 0
          %960 = vmatmul.mubr.bf16.gmra.mrb[0].mxu0 %v890
          %v961 = vpop.f32.mrb[0].mxu0
          %v962 = vadd.f32 0.0, %v961
          %v963 = vpop.f32.mrb[0].mxu0
          %v964 = vpop.f32.mrb[0].mxu0
          %v965 = vadd.f32 0.0, %v964
          %v966 = vpop.f32.mrb[0].mxu0
          %967 = vmatprep.mubr.bf16.mxu0 0
          %968 = vmatmul.mubr.bf16.gmra.mrb[0].mxu0 %v891
          %v969 = vpop.f32.mrb[0].mxu0
          %v970 = vadd.f32 0.0, %v969
          %v971 = vpop.f32.mrb[0].mxu0
          %v972 = vpop.f32.mrb[0].mxu0
          %v973 = vadd.f32 0.0, %v972
          %v974 = vpop.f32.mrb[0].mxu0
          %975 = vmatprep.mubr.bf16.mxu0 0
          %976 = vmatmul.mubr.bf16.gmra.mrb[0].mxu0 %v892
          %v977 = vpop.f32.mrb[0].mxu0
          %v978 = vadd.f32 0.0, %v977
          %v979 = vpop.f32.mrb[0].mxu0
          %v980 = vpop.f32.mrb[0].mxu0
          %v981 = vadd.f32 0.0, %v980
          %v982 = vpop.f32.mrb[0].mxu0
          %983 = vmatprep.mubr.bf16.mxu0 0
          %984 = vmatmul.mubr.bf16.gmra.mrb[0].mxu0 %v893
          %v985 = vpop.f32.mrb[0].mxu0
          %v986 = vadd.f32 0.0, %v985
          %v987 = vpop.f32.mrb[0].mxu0
          %v988 = vpop.f32.mrb[0].mxu0
          %v989 = vadd.f32 0.0, %v988
          %v990 = vpop.f32.mrb[0].mxu0
          %991 = vmatprep.mubr.bf16.mxu0 0
          %992 = vmatmul.mubr.bf16.gmra.mrb[0].mxu0 %v894
          %v993 = vpop.f32.mrb[0].mxu0
          %v994 = vadd.f32 0.0, %v993
          %v995 = vpop.f32.mrb[0].mxu0
          %v996 = vpop.f32.mrb[0].mxu0
          %v997 = vadd.f32 0.0, %v996
          %v998 = vpop.f32.mrb[0].mxu0
          %999 = vdwg.mxu0
          %v1000 = vld [vmem:[%s330] sm:$0xff]
          %v1001 = vld [vmem:[%s330 + $0x8] sm:$0xff]
          %v1002 = vld [vmem:[%s330 + $0x10] sm:$0xff]
          %v1003 = vld [vmem:[%s330 + $0x18] sm:$0xff]
          %v1004 = vld [vmem:[%s330 + $0x20] sm:$0xff]
          %v1005 = vld [vmem:[%s330 + $0x28] sm:$0xff]
          %v1006 = vld [vmem:[%s330 + $0x30] sm:$0xff]
          %v1007 = vld [vmem:[%s330 + $0x38] sm:$0xff]
          %v1008 = vld [vmem:[%s330 + $0x40] sm:$0xff]
          %v1009 = vld [vmem:[%s330 + $0x48] sm:$0xff]
          %v1010 = vld [vmem:[%s330 + $0x50] sm:$0xff]
          %v1011 = vld [vmem:[%s330 + $0x58] sm:$0xff]
          %v1012 = vld [vmem:[%s330 + $0x60] sm:$0xff]
          %v1013 = vld [vmem:[%s330 + $0x68] sm:$0xff]
          %v1014 = vld [vmem:[%s330 + $0x70] sm:$0xff]
          %v1015 = vld [vmem:[%s330 + $0x78] sm:$0xff]
          %v1016 = vld [vmem:[%s373] sm:$0x1]
          %v1018 = vlaneseq
          %v1019 = vshrl.u32 %v1018, 7
          %v1020 = vsub.s32 0, %v1019
          %v1021 = vrot.slane %v1016, %v1020
          %1023 = vmatprep.subr.mxu0 0.0
          %1024 = vmatpush1.msra.mxu0 %v1000
          %1025 = vmatprep.subr.mxu0 0.0
          %1026 = vmatpush1.msra.mxu0 %v1001
          %1027 = vmatprep.subr.mxu0 0.0
          %1028 = vmatpush1.msra.mxu0 %v1002
          %1029 = vmatprep.subr.mxu0 0.0
          %1030 = vmatpush1.msra.mxu0 %v1003
          %1031 = vmatprep.subr.mxu0 0.0
          %1032 = vmatpush1.msra.mxu0 %v1004
          %1033 = vmatprep.subr.mxu0 0.0
          %1034 = vmatpush1.msra.mxu0 %v1005
          %1035 = vmatprep.subr.mxu0 0.0
          %1036 = vmatpush1.msra.mxu0 %v1006
          %1037 = vmatprep.subr.mxu0 0.0
          %1038 = vmatpush1.msra.mxu0 %v1007
          %1039 = vmatprep.subr.mxu0 0.0
          %1040 = vmatpush1.msra.mxu0 %v1008
          %1041 = vmatprep.subr.mxu0 0.0
          %1042 = vmatpush1.msra.mxu0 %v1009
          %1043 = vmatprep.subr.mxu0 0.0
          %1044 = vmatpush1.msra.mxu0 %v1010
          %1045 = vmatprep.subr.mxu0 0.0
          %1046 = vmatpush1.msra.mxu0 %v1011
          %1047 = vmatprep.subr.mxu0 0.0
          %1048 = vmatpush1.msra.mxu0 %v1012
          %1049 = vmatprep.subr.mxu0 0.0
          %1050 = vmatpush1.msra.mxu0 %v1013
          %1051 = vmatprep.subr.mxu0 0.0
          %1052 = vmatpush1.msra.mxu0 %v1014
          %1053 = vmatprep.subr.mxu0 0.0
          %1054 = vmatpush1.msra.mxu0 %v1015
          %1055 = vmatprep.subr.mxu0 0.0
          %1056 = vmatpush1.msra.mxu0 0.0
          %1057 = vmatprep.subr.mxu0 0.0
          %1058 = vmatpush1.msra.mxu0 0.0
          %1059 = vmatprep.subr.mxu0 0.0
          %1060 = vmatpush1.msra.mxu0 0.0
          %1061 = vmatprep.subr.mxu0 0.0
          %1062 = vmatpush1.msra.mxu0 0.0
          %1063 = vmatprep.subr.mxu0 0.0
          %1064 = vmatpush1.msra.mxu0 0.0
          %1065 = vmatprep.subr.mxu0 0.0
          %1066 = vmatpush1.msra.mxu0 0.0
          %1067 = vmatprep.subr.mxu0 0.0
          %1068 = vmatpush1.msra.mxu0 0.0
          %1069 = vmatprep.subr.mxu0 0.0
          %1070 = vmatpush1.msra.mxu0 0.0
          %1071 = vmatprep.subr.mxu0 0.0
          %1072 = vmatpush1.msra.mxu0 0.0
          %1073 = vmatprep.subr.mxu0 0.0
          %1074 = vmatpush1.msra.mxu0 0.0
          %1075 = vmatprep.subr.mxu0 0.0
          %1076 = vmatpush1.msra.mxu0 0.0
          %1077 = vmatprep.subr.mxu0 0.0
          %1078 = vmatpush1.msra.mxu0 0.0
          %1079 = vmatprep.subr.mxu0 0.0
          %1080 = vmatpush1.msra.mxu0 0.0
          %1081 = vmatprep.subr.mxu0 0.0
          %1082 = vmatpush1.msra.mxu0 0.0
          %1083 = vmatprep.subr.mxu0 0.0
          %1084 = vmatpush1.msra.mxu0 0.0
          %1085 = vmatprep.subr.mxu0 0.0
          %1086 = vmatpush1.msra.mxu0 0.0
          %1087 = vmatprep.mubr.f32.mxu0 0.0
          %1088 = vmatmul.mubr.f32.gmra.mrb[0].mxu0 %v938
          %v1089 = vpop.f32.mrb[0].mxu0
          %v1090 = vadd.f32 %v1021, %v1089
          %v1091 = vpop.f32.mrb[0].mxu0
          %1092 = vmatprep.mubr.f32.mxu0 0.0
          %1093 = vmatmul.mubr.f32.gmra.mrb[0].mxu0 %v941
          %v1094 = vpop.f32.mrb[0].mxu0
          %v1095 = vadd.f32 %v1021, %v1094
          %v1096 = vpop.f32.mrb[0].mxu0
          %1097 = vmatprep.mubr.f32.mxu0 0.0
          %1098 = vmatmul.mubr.f32.gmra.mrb[0].mxu0 %v946
          %v1099 = vpop.f32.mrb[0].mxu0
          %v1100 = vadd.f32 %v1021, %v1099
          %v1101 = vpop.f32.mrb[0].mxu0
          %1102 = vmatprep.mubr.f32.mxu0 0.0
          %1103 = vmatmul.mubr.f32.gmra.mrb[0].mxu0 %v949
          %v1104 = vpop.f32.mrb[0].mxu0
          %v1105 = vadd.f32 %v1021, %v1104
          %v1106 = vpop.f32.mrb[0].mxu0
          %1107 = vmatprep.mubr.f32.mxu0 0.0
          %1108 = vmatmul.mubr.f32.gmra.mrb[0].mxu0 %v954
          %v1109 = vpop.f32.mrb[0].mxu0
          %v1110 = vadd.f32 %v1021, %v1109
          %v1111 = vpop.f32.mrb[0].mxu0
          %1112 = vmatprep.mubr.f32.mxu0 0.0
          %1113 = vmatmul.mubr.f32.gmra.mrb[0].mxu0 %v957
          %v1114 = vpop.f32.mrb[0].mxu0
          %v1115 = vadd.f32 %v1021, %v1114
          %v1116 = vpop.f32.mrb[0].mxu0
          %1117 = vmatprep.mubr.f32.mxu0 0.0
          %1118 = vmatmul.mubr.f32.gmra.mrb[0].mxu0 %v962
          %v1119 = vpop.f32.mrb[0].mxu0
          %v1120 = vadd.f32 %v1021, %v1119
          %v1121 = vpop.f32.mrb[0].mxu0
          %1122 = vmatprep.mubr.f32.mxu0 0.0
          %1123 = vmatmul.mubr.f32.gmra.mrb[0].mxu0 %v965
          %v1124 = vpop.f32.mrb[0].mxu0
          %v1125 = vadd.f32 %v1021, %v1124
          %v1126 = vpop.f32.mrb[0].mxu0
          %1127 = vmatprep.mubr.f32.mxu0 0.0
          %1128 = vmatmul.mubr.f32.gmra.mrb[0].mxu0 %v970
          %v1129 = vpop.f32.mrb[0].mxu0
          %v1130 = vadd.f32 %v1021, %v1129
          %v1131 = vpop.f32.mrb[0].mxu0
          %1132 = vmatprep.mubr.f32.mxu0 0.0
          %1133 = vmatmul.mubr.f32.gmra.mrb[0].mxu0 %v973
          %v1134 = vpop.f32.mrb[0].mxu0
          %v1135 = vadd.f32 %v1021, %v1134
          %v1136 = vpop.f32.mrb[0].mxu0
          %1137 = vmatprep.mubr.f32.mxu0 0.0
          %1138 = vmatmul.mubr.f32.gmra.mrb[0].mxu0 %v978
          %v1139 = vpop.f32.mrb[0].mxu0
          %v1140 = vadd.f32 %v1021, %v1139
          %v1141 = vpop.f32.mrb[0].mxu0
          %1142 = vmatprep.mubr.f32.mxu0 0.0
          %1143 = vmatmul.mubr.f32.gmra.mrb[0].mxu0 %v981
          %v1144 = vpop.f32.mrb[0].mxu0
          %v1145 = vadd.f32 %v1021, %v1144
          %v1146 = vpop.f32.mrb[0].mxu0
          %1147 = vmatprep.mubr.f32.mxu0 0.0
          %1148 = vmatmul.mubr.f32.gmra.mrb[0].mxu0 %v986
          %v1149 = vpop.f32.mrb[0].mxu0
          %v1150 = vadd.f32 %v1021, %v1149
          %v1151 = vpop.f32.mrb[0].mxu0
          %1152 = vmatprep.mubr.f32.mxu0 0.0
          %1153 = vmatmul.mubr.f32.gmra.mrb[0].mxu0 %v989
          %v1154 = vpop.f32.mrb[0].mxu0
          %v1155 = vadd.f32 %v1021, %v1154
          %v1156 = vpop.f32.mrb[0].mxu0
          %1157 = vmatprep.mubr.f32.mxu0 0.0
          %1158 = vmatmul.mubr.f32.gmra.mrb[0].mxu0 %v994
          %v1159 = vpop.f32.mrb[0].mxu0
          %v1160 = vadd.f32 %v1021, %v1159
          %v1161 = vpop.f32.mrb[0].mxu0
          %1162 = vmatprep.mubr.f32.mxu0 0.0
          %1163 = vmatmul.mubr.f32.gmra.mrb[0].mxu0 %v997
          %v1164 = vpop.f32.mrb[0].mxu0
          %v1165 = vadd.f32 %v1021, %v1164
          %v1166 = vpop.f32.mrb[0].mxu0
          %1167 = vdwg.mxu0
          %p1168 = scmp.ne.s32.totalorder %s29, 1
          // Predicated region
          $region77: #{tpu_custom_call.1} parent=75 // pred_check
            %p1169 = pneg %p1168
          $region78: #{tpu_custom_call.1} parent=75 // pred_check_branch
            %1171 = sbr.rel (%p1169) target = $region80
          $region79: #{tpu_custom_call.1} parent=75 // pred_region
            %v1172 = vmax.f32 %v1090, 0.0
            %v1173 = vmax.f32 %v1095, 0.0
            %v1174 = vmax.f32 %v1100, 0.0
            %v1175 = vmax.f32 %v1105, 0.0
            %v1176 = vmax.f32 %v1110, 0.0
            %v1177 = vmax.f32 %v1115, 0.0
            %v1178 = vmax.f32 %v1120, 0.0
            %v1179 = vmax.f32 %v1125, 0.0
            %v1180 = vmax.f32 %v1130, 0.0
            %v1181 = vmax.f32 %v1135, 0.0
            %v1182 = vmax.f32 %v1140, 0.0
            %v1183 = vmax.f32 %v1145, 0.0
            %v1184 = vmax.f32 %v1150, 0.0
            %v1185 = vmax.f32 %v1155, 0.0
            %v1186 = vmax.f32 %v1160, 0.0
            %v1187 = vmax.f32 %v1165, 0.0
            %v1188 = vpack.c.bf16 %v1173, %v1172
            %v1189 = vpack.c.bf16 %v1175, %v1174
            %v1190 = vpack.c.bf16 %v1177, %v1176
            %v1191 = vpack.c.bf16 %v1179, %v1178
            %v1192 = vpack.c.bf16 %v1181, %v1180
            %v1193 = vpack.c.bf16 %v1183, %v1182
            %v1194 = vpack.c.bf16 %v1185, %v1184
            %v1195 = vpack.c.bf16 %v1187, %v1186
            %s1196 = sshra.s32 %s381, 4
            %s1197 = sand.u32 %s381, 15
            %s1198 = smul.addr %s1196, 8
            %s1199 = scalar_lea.vmem [#allocation2], %s1198
            %1200 = vst [vmem:[%s1199] sm:$0xff] %v1188
            %1201 = vst [vmem:[%s1199 + $0x8] sm:$0xff] %v1189
            %1202 = vst [vmem:[%s1199 + $0x10] sm:$0xff] %v1190
            %1203 = vst [vmem:[%s1199 + $0x18] sm:$0xff] %v1191
            %1204 = vst [vmem:[%s1199 + $0x20] sm:$0xff] %v1192
            %1205 = vst [vmem:[%s1199 + $0x28] sm:$0xff] %v1193
            %1206 = vst [vmem:[%s1199 + $0x30] sm:$0xff] %v1194
            %1207 = vst [vmem:[%s1199 + $0x38] sm:$0xff] %v1195
          $region80: #{tpu_custom_call.1} parent=75 // pred_fallthru
            _
          // Predicated region
          $region81: #{tpu_custom_call.1} parent=75 // pred_check
            %p1208 = pneg %p382
          $region82: #{tpu_custom_call.1} parent=75 // pred_check_branch
            %1210 = sbr.rel (%p1208) target = $region84
          $region83: #{tpu_custom_call.1} parent=75 // pred_region
            %1211 = vst [vmem:[%s364] sm:$0xff] %v1090
            %1212 = vst [vmem:[%s364 + $0x8] sm:$0xff] %v1095
            %1213 = vst [vmem:[%s364 + $0x10] sm:$0xff] %v1100
            %1214 = vst [vmem:[%s364 + $0x18] sm:$0xff] %v1105
            %1215 = vst [vmem:[%s364 + $0x20] sm:$0xff] %v1110
            %1216 = vst [vmem:[%s364 + $0x28] sm:$0xff] %v1115
            %1217 = vst [vmem:[%s364 + $0x30] sm:$0xff] %v1120
            %1218 = vst [vmem:[%s364 + $0x38] sm:$0xff] %v1125
            %1219 = vst [vmem:[%s364 + $0x40] sm:$0xff] %v1130
            %1220 = vst [vmem:[%s364 + $0x48] sm:$0xff] %v1135
            %1221 = vst [vmem:[%s364 + $0x50] sm:$0xff] %v1140
            %1222 = vst [vmem:[%s364 + $0x58] sm:$0xff] %v1145
            %1223 = vst [vmem:[%s364 + $0x60] sm:$0xff] %v1150
            %1224 = vst [vmem:[%s364 + $0x68] sm:$0xff] %v1155
            %1225 = vst [vmem:[%s364 + $0x70] sm:$0xff] %v1160
            %1226 = vst [vmem:[%s364 + $0x78] sm:$0xff] %v1165
          $region84: #{tpu_custom_call.1} parent=75 // pred_fallthru
            _
        $region76: #{tpu_custom_call.1} parent=43 // pred_fallthru
          _
        %s1227 = sand.u32 %s197, 1
        %s1228 = scalar_lea.sflag [#allocation5], %s1227
        %s1229 = sand.u32 %s197, 1
        %s1230 = smul.addr %s1229, 128
        %s1231 = scalar_lea.vmem [#allocation11], %s1230
        // Predicated region
        $region85: #{tpu_custom_call.1} parent=43 // pred_check
          %p1232 = pneg %p207
        $region86: #{tpu_custom_call.1} parent=43 // pred_check_branch
          %1234 = sbr.rel (%p1232) target = $region88
        $region87: #{tpu_custom_call.1} parent=43 // pred_region
          %p1235 = scmp.eq.s32.totalorder %s29, 1
          %s1236 = scalar_select %p1235, %s30, 0
          %s1237 = smul.u32 16, %s1236
          %s1239 = ssub.s32 2048, 2048
          %1240 = vsyncadd %s1228, %s1239
          %s1241 = smul.addr %s1237, 128
          %s1242 = scalar_lea.hbm %s6, %s1241
          %s1243 = sshll.u32 %s1231, 4
          %s1244 = int_to_ptr.vmem [resolvable:$true] %s1243
          %1249 = dma.vmem_to_hbm [thread:$0]  %s1244, 2048, %s1242, %s1228, 128, 128, 8
        $region88: #{tpu_custom_call.1} parent=43 // pred_fallthru
          _
      $region44: #{tpu_custom_call.1} parent=5 // pred_fallthru
        _
      %p1250 = scmp.le.s32.totalorder 2, %s20
      // Predicated region
      $region89: #{tpu_custom_call.1} parent=5 // pred_check
        %p1251 = pneg %p1250
      $region90: #{tpu_custom_call.1} parent=5 // pred_check_branch
        %1253 = sbr.rel (%p1251) target = $region92
      $region91: #{tpu_custom_call.1} parent=5 // pred_region
        %s1254 = ssub.s32 %s20, 2
        // Predicated region
        $region93: #{tpu_custom_call.1} parent=91 // pred_check
          %p1255 = pneg %p213
        $region94: #{tpu_custom_call.1} parent=91 // pred_check_branch
          %1257 = sbr.rel (%p1255) target = $region96
        $region95: #{tpu_custom_call.1} parent=91 // pred_region
          %s1258 = sand.u32 %s198, 1
          %s1259 = scalar_lea.sflag [#allocation5], %s1258
          %s1260 = sand.u32 %s198, 1
          %s1261 = smul.addr %s1260, 128
          %s1262 = scalar_lea.vmem [#allocation11], %s1261
          %1263 = dma.done %s1259, 2048
        $region96: #{tpu_custom_call.1} parent=91 // pred_fallthru
          _
      $region92: #{tpu_custom_call.1} parent=5 // pred_fallthru
        _
    $region6: #{tpu_custom_call.1} parent=1 // loop_footer
      %s24 = sadd.s32 1, %s20
    $region7: #{tpu_custom_call.1} parent=1 // loop_footer_branch
      %19 = sbr.rel target = $region3
    $region8: #{tpu_custom_call.1} parent=1 // loop_exit
      _
    %1264 = vsyncpa [#allocation4], 1
    %s1265 = scalar_lea.sflag [#allocation4], 1
    %1266 = vsyncpa %s1265, 1
    %1267 = vsyncpa [#allocation7], 1
    %1268 = vsyncpa [#allocation10], 1
    %s1269 = scalar_lea.sflag [#allocation10], 1
    %1270 = vsyncpa %s1269, 1
    %1271 = vsyncpa [#allocation5], 1
    %s1272 = scalar_lea.sflag [#allocation5], 1
    %1273 = vsyncpa %s1272, 1

</llo_original>
